<compile_context>
chip_gen: v7x
topology: tpu7x:2x2x1
jax: 0.10.0
libtpu: 0.0.40
codegen_flags: <defaults>
</compile_context>

<pallas_src>
import math

import jax
import jax.numpy as jnp
from jax.experimental import pallas as pl
from jax.experimental.pallas import tpu as pltpu

# ----------------------------- small synthetic BERT config ------------------
VOCAB = 100
HIDDEN = 32
N_LAYERS = 2
N_HEADS = 2
HEAD_DIM = HIDDEN // N_HEADS
INTER = 4 * HIDDEN          # must equal 4*HIDDEN for the packed-vector layout
MAX_POS = 16
TYPE_VOCAB = 2
NUM_LABELS = 3
LN_EPS = 1e-12

assert INTER == 4 * HIDDEN


def _layernorm(x, g, b):
    mu = jnp.mean(x, axis=-1, keepdims=True)
    var = jnp.mean((x - mu) ** 2, axis=-1, keepdims=True)
    return (x - mu) * jax.lax.rsqrt(var + LN_EPS) * g + b


def _gelu(x):
    # TODO(synk): HF BERT uses the exact (erf) GELU; tanh approximation kept here
    # as a guaranteed Mosaic-safe transcendental path (small numeric divergence).
    c = math.sqrt(2.0 / math.pi)
    return 0.5 * x * (1.0 + jnp.tanh(c * (x + 0.044715 * x * x * x)))


# --------------------- fused encoder + pool + classifier kernel -------------
def bert_fused_kernel(x_ref, bias_ref, pool_ref, wqkvo_ref, vec_ref,
                      w1_ref, w2_ref, clsw_ref, clsb_ref, logits_ref):
    H, NH, HD, NL = HIDDEN, N_HEADS, HEAD_DIM, N_LAYERS
    scale = 1.0 / math.sqrt(HD)

    x = x_ref[...]                        # (B*S, H) f32, stays in VMEM
    bias = bias_ref[...]                  # (B*S, B*S) block-diag additive bias

    for l in range(NL):                   # static layer loop (NL=2)
        w_attn = wqkvo_ref[l]             # (H, 4H) = [Wq | Wk | Wv | Wo]
        vec = vec_ref[l]                  # (4, 128) packed vectors
        b_qkvo = vec[0:1, :]              # (1, 4H)  [bq|bk|bv|bo]
        b_o = vec[0:1, 3 * H:4 * H]       # (1, H)
        b_1 = vec[1:2, :]                 # (1, INTER)
        ln1_g = vec[2:3, 0 * H:1 * H]
        ln1_b = vec[2:3, 1 * H:2 * H]
        ln2_g = vec[2:3, 2 * H:3 * H]
        ln2_b = vec[2:3, 3 * H:4 * H]
        b_2 = vec[3:4, :H]                # (1, H)

        # Full 128-lane fused projection: one (B*S,H) x (H,4H) MXU matmul with
        # an unmasked-lane result layout. The 4th H-block of the result is
        # unused (Wo is applied to per-head context below).
        qkvo = jnp.dot(x, w_attn, preferred_element_type=jnp.float32) + b_qkvo
        wo = w_attn[:, 3 * H:]            # (H, H)

        # Multi-head attention over the flattened B*S axis; the block-diagonal
        # bias enforces per-sequence attention and key padding in one shot.
        # Each head's context is folded through the matching Wo row-block and
        # accumulated (no lane-axis head concat).
        acc = jnp.zeros(x.shape, jnp.float32)
        for h in range(NH):               # static head loop (NH=2), one chain
            qh = qkvo[:, h * HD:(h + 1) * HD]
            kh = qkvo[:, H + h * HD:H + (h + 1) * HD]
            vh = qkvo[:, 2 * H + h * HD:2 * H + (h + 1) * HD]
            s = jnp.einsum('qd,kd->qk', qh, kh,
                           preferred_element_type=jnp.float32) * scale + bias
            s = s - jnp.max(s, axis=-1, keepdims=True)
            p = jnp.exp(s)
            p = p * pl.reciprocal(jnp.sum(p, axis=-1, keepdims=True),
                                  approx=True)
            ch = jnp.dot(p, vh, preferred_element_type=jnp.float32)   # (B*S, HD)
            acc = acc + jnp.dot(ch, wo[h * HD:(h + 1) * HD, :],
                                preferred_element_type=jnp.float32)
        attn_out = acc + b_o              # bias broadcast hoisted, once/layer

        x1 = _layernorm(x + attn_out, ln1_g, ln1_b)

        hmid = _gelu(jnp.dot(x1, w1_ref[l],
                             preferred_element_type=jnp.float32) + b_1)
        ffn = jnp.dot(hmid, w2_ref[l], preferred_element_type=jnp.float32) + b_2
        x = _layernorm(x1 + ffn, ln2_g, ln2_b)

    # --- masked mean pooling + classification head (module's own compute) ---
    # Pooling matrix has the clamped denominator pre-divided in -> one matmul.
    avg = jnp.dot(pool_ref[...], x, preferred_element_type=jnp.float32)  # (B, H)
    logits_ref[...] = (jnp.dot(avg, clsw_ref[...],
                               preferred_element_type=jnp.float32)
                       + clsb_ref[...])


def bert_encoder_classify(x_emb, attention_mask, packed, cls_w, cls_b):
    """One fused, grid-free pallas_call: all encoder layers + pooling + head."""
    B, S, H = x_emb.shape
    L = cls_w.shape[1]
    x2 = x_emb.reshape(B * S, H).astype(jnp.float32)
    mask_f = attention_mask.astype(jnp.float32)          # (B, S) 1.0 / 0.0

    # Block-diagonal additive attention bias over the flattened B*S axis:
    # entry (i, j) is 0 iff i and j are in the same sequence AND key j is kept.
    same_batch = jnp.kron(jnp.eye(B, dtype=jnp.float32),
                          jnp.ones((S, S), jnp.float32))          # (B*S, B*S)
    key_ok = mask_f.reshape(1, B * S)
    attn_bias = (1.0 - same_batch * key_ok) * (-1e9)

    # Masked-mean pooling matrix (B, B*S): block-diagonal mask rows already
    # divided by the clamped token count -> kernel does a single P @ x.
    denom = jnp.maximum(jnp.sum(mask_f, axis=-1, keepdims=True), 1.0)  # (B, 1)
    pool = (jnp.eye(B, dtype=jnp.float32)[:, :, None]
            * (mask_f / denom)[None, :, :]).reshape(B, B * S)

    w_qkvo, vecs, w1, w2 = packed

    # No grid: whole arrays resident in VMEM, no double-buffering of the
    # grid-invariant weights, per-call overhead paid exactly once.
    vspec = pl.BlockSpec(memory_space=pltpu.MemorySpace.VMEM)
    return pl.pallas_call(
        bert_fused_kernel,
        in_specs=[vspec] * 9,
        out_specs=vspec,
        out_shape=jax.ShapeDtypeStruct((B, L), jnp.float32),
    )(x2, attn_bias, pool, w_qkvo, vecs, w1, w2, cls_w, cls_b)


# ----------------------------- parameter packing ----------------------------
def pack_layer_params(params):
    """Stack per-layer weights and pack the 12 tiny vectors into (NL,4,128)."""
    P = 4 * HIDDEN
    w_qkvo, vecs, w1, w2 = [], [], [], []
    for lp in params['layers']:
        w_qkvo.append(jnp.concatenate(
            [lp['wq'], lp['wk'], lp['wv'], lp['wo']], axis=1))            # (H, 4H)
        row0 = jnp.concatenate([lp['bq'], lp['bk'], lp['bv'], lp['bo']], axis=1)
        row1 = lp['b1']                                                   # (1, INTER)
        row2 = jnp.concatenate([lp['ln1_g'], lp['ln1_b'],
                                lp['ln2_g'], lp['ln2_b']], axis=1)
        row3 = jnp.concatenate(
            [lp['b2'], jnp.zeros((1, P - HIDDEN), jnp.float32)], axis=1)
        vecs.append(jnp.concatenate([row0, row1, row2, row3], axis=0))    # (4, 128)
        w1.append(lp['w1'])
        w2.append(lp['w2'])
    return (jnp.stack(w_qkvo), jnp.stack(vecs), jnp.stack(w1), jnp.stack(w2))


# ----------------------------- parameters & forward -------------------------
def init_params(key):
    def nrm(k, shape):
        return (0.02 * jax.random.normal(k, shape)).astype(jnp.float32)

    keys = jax.random.split(key, 4 + N_LAYERS)
    params = {
        'word_emb': nrm(keys[0], (VOCAB, HIDDEN)),
        'pos_emb': nrm(keys[1], (MAX_POS, HIDDEN)),
        'type_emb': nrm(keys[2], (TYPE_VOCAB, HIDDEN)),
        'emb_ln_g': jnp.ones((1, HIDDEN), jnp.float32),
        'emb_ln_b': jnp.zeros((1, HIDDEN), jnp.float32),
        'layers': [],
        'cls_w': nrm(keys[3], (HIDDEN, NUM_LABELS)),
        'cls_b': jnp.zeros((1, NUM_LABELS), jnp.float32),
    }
    for li in range(N_LAYERS):
        lk = jax.random.split(keys[4 + li], 6)
        params['layers'].append({
            'wq': nrm(lk[0], (HIDDEN, HIDDEN)), 'bq': jnp.zeros((1, HIDDEN), jnp.float32),
            'wk': nrm(lk[1], (HIDDEN, HIDDEN)), 'bk': jnp.zeros((1, HIDDEN), jnp.float32),
            'wv': nrm(lk[2], (HIDDEN, HIDDEN)), 'bv': jnp.zeros((1, HIDDEN), jnp.float32),
            'wo': nrm(lk[3], (HIDDEN, HIDDEN)), 'bo': jnp.zeros((1, HIDDEN), jnp.float32),
            'ln1_g': jnp.ones((1, HIDDEN), jnp.float32),
            'ln1_b': jnp.zeros((1, HIDDEN), jnp.float32),
            'w1': nrm(lk[4], (HIDDEN, INTER)), 'b1': jnp.zeros((1, INTER), jnp.float32),
            'w2': nrm(lk[5], (INTER, HIDDEN)), 'b2': jnp.zeros((1, HIDDEN), jnp.float32),
            'ln2_g': jnp.ones((1, HIDDEN), jnp.float32),
            'ln2_b': jnp.zeros((1, HIDDEN), jnp.float32),
        })
    return params


def bert_forward(params, input_ids, attention_mask, token_type_ids, labels=None):
    B, S = input_ids.shape
    # --- embeddings (data-dependent gather + LN): thin JAX glue ---
    emb = (params['word_emb'][input_ids]
           + params['pos_emb'][jnp.arange(S)][None, :, :]
           + params['type_emb'][token_type_ids])
    x = _layernorm(emb, params['emb_ln_g'], params['emb_ln_b'])

    packed = pack_layer_params(params)
    logits = bert_encoder_classify(x, attention_mask, packed,
                                   params['cls_w'], params['cls_b'])

    output = {'logits': logits}
    if labels is not None:
        y = labels.astype(jnp.float32)
        s = logits
        # BCEWithLogitsLoss (mean reduction) — tiny elementwise glue in plain JAX.
        loss = jnp.mean(jnp.maximum(s, 0.0) - s * y + jnp.log1p(jnp.exp(-jnp.abs(s))))
        output['loss'] = loss
    return output


# ----------------------------------- main ------------------------------------
if __name__ == "__main__":
    key = jax.random.PRNGKey(0)
    kp, kids, klab = jax.random.split(key, 3)

    params = init_params(kp)

    B, S = 2, 8
    input_ids = jax.random.randint(kids, (B, S), 0, VOCAB, dtype=jnp.int32)
    attention_mask = jnp.array([[1, 1, 1, 1, 1, 1, 1, 1],
                                [1, 1, 1, 1, 1, 1, 0, 0]], dtype=jnp.int32)
    token_type_ids = jnp.zeros((B, S), dtype=jnp.int32)
    labels = jax.random.bernoulli(klab, 0.5, (B, NUM_LABELS)).astype(jnp.int32)

    fwd = jax.jit(bert_forward)
    out = fwd(params, input_ids, attention_mask, token_type_ids, labels)
    jax.block_until_ready(out['logits'])
    jax.block_until_ready(out['loss'])

    assert out['logits'].shape == (B, NUM_LABELS)
    assert out['loss'].shape == ()
    print("KERNEL_OK")
</pallas_src>

<mosaic_0001>
module attributes {stable_mosaic.version = 11 : i64} {
  func.func @bert_fused_kernel(%arg0: memref<16x32xf32, #tpu.memory_space<vmem>>, %arg1: memref<16x16xf32, #tpu.memory_space<vmem>>, %arg2: memref<2x16xf32, #tpu.memory_space<vmem>>, %arg3: memref<2x32x128xf32, #tpu.memory_space<vmem>>, %arg4: memref<2x4x128xf32, #tpu.memory_space<vmem>>, %arg5: memref<2x32x128xf32, #tpu.memory_space<vmem>>, %arg6: memref<2x128x32xf32, #tpu.memory_space<vmem>>, %arg7: memref<32x3xf32, #tpu.memory_space<vmem>>, %arg8: memref<1x3xf32, #tpu.memory_space<vmem>>, %arg9: memref<2x3xf32, #tpu.memory_space<vmem>>) attributes {dimension_semantics = [], scalar_prefetch = 0 : i64, scratch_operands = 0 : i64, tpu.core_type = #tpu.core_type<tc>} {
    %c0 = arith.constant 0 : index
    %c0_0 = arith.constant 0 : index
    %0 = vector.load %arg0[%c0, %c0_0] : memref<16x32xf32, #tpu.memory_space<vmem>>, vector<16x32xf32>
    %c0_1 = arith.constant 0 : index
    %c0_2 = arith.constant 0 : index
    %1 = vector.load %arg1[%c0_1, %c0_2] : memref<16x16xf32, #tpu.memory_space<vmem>>, vector<16x16xf32>
    %c0_3 = arith.constant 0 : index
    %c0_4 = arith.constant 0 : index
    %c0_5 = arith.constant 0 : index
    %2 = vector.load %arg3[%c0_3, %c0_4, %c0_5] : memref<2x32x128xf32, #tpu.memory_space<vmem>>, vector<1x32x128xf32>
    %3 = vector.shape_cast %2 : vector<1x32x128xf32> to vector<32x128xf32>
    %c0_6 = arith.constant 0 : index
    %c0_7 = arith.constant 0 : index
    %c0_8 = arith.constant 0 : index
    %4 = vector.load %arg4[%c0_6, %c0_7, %c0_8] : memref<2x4x128xf32, #tpu.memory_space<vmem>>, vector<1x4x128xf32>
    %5 = vector.shape_cast %4 : vector<1x4x128xf32> to vector<4x128xf32>
    %6 = vector.extract_strided_slice %5 {offsets = [0, 0], sizes = [1, 128], strides = [1, 1]} : vector<4x128xf32> to vector<1x128xf32>
    %7 = vector.extract_strided_slice %5 {offsets = [0, 96], sizes = [1, 32], strides = [1, 1]} : vector<4x128xf32> to vector<1x32xf32>
    %8 = vector.extract_strided_slice %5 {offsets = [1, 0], sizes = [1, 128], strides = [1, 1]} : vector<4x128xf32> to vector<1x128xf32>
    %9 = vector.extract_strided_slice %5 {offsets = [2, 0], sizes = [1, 32], strides = [1, 1]} : vector<4x128xf32> to vector<1x32xf32>
    %10 = vector.extract_strided_slice %5 {offsets = [2, 32], sizes = [1, 32], strides = [1, 1]} : vector<4x128xf32> to vector<1x32xf32>
    %11 = vector.extract_strided_slice %5 {offsets = [2, 64], sizes = [1, 32], strides = [1, 1]} : vector<4x128xf32> to vector<1x32xf32>
    %12 = vector.extract_strided_slice %5 {offsets = [2, 96], sizes = [1, 32], strides = [1, 1]} : vector<4x128xf32> to vector<1x32xf32>
    %13 = vector.extract_strided_slice %5 {offsets = [3, 0], sizes = [1, 32], strides = [1, 1]} : vector<4x128xf32> to vector<1x32xf32>
    %cst = arith.constant dense<0.000000e+00> : vector<16x128xf32>
    %14 = tpu.matmul %0, %3, %cst {dimension_numbers = #tpu.dot_dimension_numbers<[1], [0], [0], [1], [0, 0, 1, 1], [], []>} : vector<16x32xf32>, vector<32x128xf32>, vector<16x128xf32> -> vector<16x128xf32>
    %15 = vector.broadcast %6 : vector<1x128xf32> to vector<16x128xf32>
    %16 = arith.addf %14, %15 : vector<16x128xf32>
    %17 = vector.extract_strided_slice %3 {offsets = [0, 96], sizes = [32, 32], strides = [1, 1]} : vector<32x128xf32> to vector<32x32xf32>
    %cst_9 = arith.constant 0.000000e+00 : f32
    %18 = vector.broadcast %cst_9 : f32 to vector<16x32xf32>
    %19 = vector.extract_strided_slice %16 {offsets = [0, 0], sizes = [16, 16], strides = [1, 1]} : vector<16x128xf32> to vector<16x16xf32>
    %20 = vector.extract_strided_slice %16 {offsets = [0, 32], sizes = [16, 16], strides = [1, 1]} : vector<16x128xf32> to vector<16x16xf32>
    %21 = vector.extract_strided_slice %16 {offsets = [0, 64], sizes = [16, 16], strides = [1, 1]} : vector<16x128xf32> to vector<16x16xf32>
    "tpu.trace_start"() <{level = 10 : i32, message = "qd,kd->qk"}> : () -> ()
    %cst_10 = arith.constant dense<0.000000e+00> : vector<16x16xf32>
    %22 = tpu.matmul %19, %20, %cst_10 {dimension_numbers = #tpu.dot_dimension_numbers<[1], [1], [0], [0], [0, 0, 1, 0], [], []>} : vector<16x16xf32>, vector<16x16xf32>, vector<16x16xf32> -> vector<16x16xf32>
    "tpu.trace_stop"() : () -> ()
    %cst_11 = arith.constant 2.500000e-01 : f32
    %23 = vector.broadcast %cst_11 : f32 to vector<16x16xf32>
    %24 = arith.mulf %22, %23 : vector<16x16xf32>
    %25 = arith.addf %24, %1 : vector<16x16xf32>
    %cst_12 = arith.constant dense<0xFF800000> : vector<16xf32>
    %26 = vector.multi_reduction <maximumf>, %25, %cst_12 [1] : vector<16x16xf32> to vector<16xf32>
    %27 = vector.shape_cast %26 : vector<16xf32> to vector<16x1xf32>
    %28 = vector.broadcast %27 : vector<16x1xf32> to vector<16x16xf32>
    %29 = arith.subf %25, %28 : vector<16x16xf32>
    %30 = math.exp %29 : vector<16x16xf32>
    %cst_13 = arith.constant dense<0.000000e+00> : vector<16xf32>
    %31 = vector.multi_reduction <add>, %30, %cst_13 [1] : vector<16x16xf32> to vector<16xf32>
    %32 = vector.shape_cast %31 : vector<16xf32> to vector<16x1xf32>
    %33 = tpu.reciprocal %32 {approx = true} : vector<16x1xf32> -> vector<16x1xf32>
    %34 = vector.broadcast %33 : vector<16x1xf32> to vector<16x16xf32>
    %35 = arith.mulf %30, %34 : vector<16x16xf32>
    %cst_14 = arith.constant dense<0.000000e+00> : vector<16x16xf32>
    %36 = tpu.matmul %35, %21, %cst_14 {dimension_numbers = #tpu.dot_dimension_numbers<[1], [0], [0], [1], [0, 0, 1, 1], [], []>} : vector<16x16xf32>, vector<16x16xf32>, vector<16x16xf32> -> vector<16x16xf32>
    %37 = vector.extract_strided_slice %17 {offsets = [0, 0], sizes = [16, 32], strides = [1, 1]} : vector<32x32xf32> to vector<16x32xf32>
    %cst_15 = arith.constant dense<0.000000e+00> : vector<16x32xf32>
    %38 = tpu.matmul %36, %37, %cst_15 {dimension_numbers = #tpu.dot_dimension_numbers<[1], [0], [0], [1], [0, 0, 1, 1], [], []>} : vector<16x16xf32>, vector<16x32xf32>, vector<16x32xf32> -> vector<16x32xf32>
    %39 = arith.addf %18, %38 : vector<16x32xf32>
    %40 = vector.extract_strided_slice %16 {offsets = [0, 16], sizes = [16, 16], strides = [1, 1]} : vector<16x128xf32> to vector<16x16xf32>
    %41 = vector.extract_strided_slice %16 {offsets = [0, 48], sizes = [16, 16], strides = [1, 1]} : vector<16x128xf32> to vector<16x16xf32>
    %42 = vector.extract_strided_slice %16 {offsets = [0, 80], sizes = [16, 16], strides = [1, 1]} : vector<16x128xf32> to vector<16x16xf32>
    "tpu.trace_start"() <{level = 10 : i32, message = "qd,kd->qk"}> : () -> ()
    %cst_16 = arith.constant dense<0.000000e+00> : vector<16x16xf32>
    %43 = tpu.matmul %40, %41, %cst_16 {dimension_numbers = #tpu.dot_dimension_numbers<[1], [1], [0], [0], [0, 0, 1, 0], [], []>} : vector<16x16xf32>, vector<16x16xf32>, vector<16x16xf32> -> vector<16x16xf32>
    "tpu.trace_stop"() : () -> ()
    %cst_17 = arith.constant 2.500000e-01 : f32
    %44 = vector.broadcast %cst_17 : f32 to vector<16x16xf32>
    %45 = arith.mulf %43, %44 : vector<16x16xf32>
    %46 = arith.addf %45, %1 : vector<16x16xf32>
    %cst_18 = arith.constant dense<0xFF800000> : vector<16xf32>
    %47 = vector.multi_reduction <maximumf>, %46, %cst_18 [1] : vector<16x16xf32> to vector<16xf32>
    %48 = vector.shape_cast %47 : vector<16xf32> to vector<16x1xf32>
    %49 = vector.broadcast %48 : vector<16x1xf32> to vector<16x16xf32>
    %50 = arith.subf %46, %49 : vector<16x16xf32>
    %51 = math.exp %50 : vector<16x16xf32>
    %cst_19 = arith.constant dense<0.000000e+00> : vector<16xf32>
    %52 = vector.multi_reduction <add>, %51, %cst_19 [1] : vector<16x16xf32> to vector<16xf32>
    %53 = vector.shape_cast %52 : vector<16xf32> to vector<16x1xf32>
    %54 = tpu.reciprocal %53 {approx = true} : vector<16x1xf32> -> vector<16x1xf32>
    %55 = vector.broadcast %54 : vector<16x1xf32> to vector<16x16xf32>
    %56 = arith.mulf %51, %55 : vector<16x16xf32>
    %cst_20 = arith.constant dense<0.000000e+00> : vector<16x16xf32>
    %57 = tpu.matmul %56, %42, %cst_20 {dimension_numbers = #tpu.dot_dimension_numbers<[1], [0], [0], [1], [0, 0, 1, 1], [], []>} : vector<16x16xf32>, vector<16x16xf32>, vector<16x16xf32> -> vector<16x16xf32>
    %58 = vector.extract_strided_slice %17 {offsets = [16, 0], sizes = [16, 32], strides = [1, 1]} : vector<32x32xf32> to vector<16x32xf32>
    %cst_21 = arith.constant dense<0.000000e+00> : vector<16x32xf32>
    %59 = tpu.matmul %57, %58, %cst_21 {dimension_numbers = #tpu.dot_dimension_numbers<[1], [0], [0], [1], [0, 0, 1, 1], [], []>} : vector<16x16xf32>, vector<16x32xf32>, vector<16x32xf32> -> vector<16x32xf32>
    %60 = arith.addf %39, %59 : vector<16x32xf32>
    %61 = vector.broadcast %7 : vector<1x32xf32> to vector<16x32xf32>
    %62 = arith.addf %60, %61 : vector<16x32xf32>
    %63 = arith.addf %0, %62 : vector<16x32xf32>
    %cst_22 = arith.constant dense<0.000000e+00> : vector<16xf32>
    %64 = vector.multi_reduction <add>, %63, %cst_22 [1] : vector<16x32xf32> to vector<16xf32>
    %65 = vector.shape_cast %64 : vector<16xf32> to vector<16x1xf32>
    %cst_23 = arith.constant 3.200000e+01 : f32
    %66 = vector.broadcast %cst_23 : f32 to vector<16x1xf32>
    %67 = arith.divf %65, %66 : vector<16x1xf32>
    %68 = vector.broadcast %67 : vector<16x1xf32> to vector<16x32xf32>
    %69 = arith.subf %63, %68 : vector<16x32xf32>
    %70 = arith.mulf %69, %69 : vector<16x32xf32>
    %cst_24 = arith.constant dense<0.000000e+00> : vector<16xf32>
    %71 = vector.multi_reduction <add>, %70, %cst_24 [1] : vector<16x32xf32> to vector<16xf32>
    %72 = vector.shape_cast %71 : vector<16xf32> to vector<16x1xf32>
    %cst_25 = arith.constant 3.200000e+01 : f32
    %73 = vector.broadcast %cst_25 : f32 to vector<16x1xf32>
    %74 = arith.divf %72, %73 : vector<16x1xf32>
    %75 = vector.broadcast %67 : vector<16x1xf32> to vector<16x32xf32>
    %76 = arith.subf %63, %75 : vector<16x32xf32>
    %cst_26 = arith.constant 9.99999996E-13 : f32
    %77 = vector.broadcast %cst_26 : f32 to vector<16x1xf32>
    %78 = arith.addf %74, %77 : vector<16x1xf32>
    %79 = math.rsqrt %78 : vector<16x1xf32>
    %80 = vector.broadcast %79 : vector<16x1xf32> to vector<16x32xf32>
    %81 = arith.mulf %76, %80 : vector<16x32xf32>
    %82 = vector.broadcast %9 : vector<1x32xf32> to vector<16x32xf32>
    %83 = arith.mulf %81, %82 : vector<16x32xf32>
    %84 = vector.broadcast %10 : vector<1x32xf32> to vector<16x32xf32>
    %85 = arith.addf %83, %84 : vector<16x32xf32>
    %c0_27 = arith.constant 0 : index
    %c0_28 = arith.constant 0 : index
    %c0_29 = arith.constant 0 : index
    %86 = vector.load %arg5[%c0_27, %c0_28, %c0_29] : memref<2x32x128xf32, #tpu.memory_space<vmem>>, vector<1x32x128xf32>
    %87 = vector.shape_cast %86 : vector<1x32x128xf32> to vector<32x128xf32>
    %cst_30 = arith.constant dense<0.000000e+00> : vector<16x128xf32>
    %88 = tpu.matmul %85, %87, %cst_30 {dimension_numbers = #tpu.dot_dimension_numbers<[1], [0], [0], [1], [0, 0, 1, 1], [], []>} : vector<16x32xf32>, vector<32x128xf32>, vector<16x128xf32> -> vector<16x128xf32>
    %89 = vector.broadcast %8 : vector<1x128xf32> to vector<16x128xf32>
    %90 = arith.addf %88, %89 : vector<16x128xf32>
    %cst_31 = arith.constant 5.000000e-01 : f32
    %91 = vector.broadcast %cst_31 : f32 to vector<16x128xf32>
    %92 = arith.mulf %91, %90 : vector<16x128xf32>
    %cst_32 = arith.constant 4.471500e-02 : f32
    %93 = vector.broadcast %cst_32 : f32 to vector<16x128xf32>
    %94 = arith.mulf %93, %90 : vector<16x128xf32>
    %95 = arith.mulf %94, %90 : vector<16x128xf32>
    %96 = arith.mulf %95, %90 : vector<16x128xf32>
    %97 = arith.addf %90, %96 : vector<16x128xf32>
    %cst_33 = arith.constant 0.797884583 : f32
    %98 = vector.broadcast %cst_33 : f32 to vector<16x128xf32>
    %99 = arith.mulf %98, %97 : vector<16x128xf32>
    %100 = math.tanh %99 : vector<16x128xf32>
    %cst_34 = arith.constant 1.000000e+00 : f32
    %101 = vector.broadcast %cst_34 : f32 to vector<16x128xf32>
    %102 = arith.addf %101, %100 : vector<16x128xf32>
    %103 = arith.mulf %92, %102 : vector<16x128xf32>
    %c0_35 = arith.constant 0 : index
    %c0_36 = arith.constant 0 : index
    %c0_37 = arith.constant 0 : index
    %104 = vector.load %arg6[%c0_35, %c0_36, %c0_37] : memref<2x128x32xf32, #tpu.memory_space<vmem>>, vector<1x128x32xf32>
    %105 = vector.shape_cast %104 : vector<1x128x32xf32> to vector<128x32xf32>
    %cst_38 = arith.constant dense<0.000000e+00> : vector<16x32xf32>
    %106 = tpu.matmul %103, %105, %cst_38 {dimension_numbers = #tpu.dot_dimension_numbers<[1], [0], [0], [1], [0, 0, 1, 1], [], []>} : vector<16x128xf32>, vector<128x32xf32>, vector<16x32xf32> -> vector<16x32xf32>
    %107 = vector.broadcast %13 : vector<1x32xf32> to vector<16x32xf32>
    %108 = arith.addf %106, %107 : vector<16x32xf32>
    %109 = arith.addf %85, %108 : vector<16x32xf32>
    %cst_39 = arith.constant dense<0.000000e+00> : vector<16xf32>
    %110 = vector.multi_reduction <add>, %109, %cst_39 [1] : vector<16x32xf32> to vector<16xf32>
    %111 = vector.shape_cast %110 : vector<16xf32> to vector<16x1xf32>
    %cst_40 = arith.constant 3.200000e+01 : f32
    %112 = vector.broadcast %cst_40 : f32 to vector<16x1xf32>
    %113 = arith.divf %111, %112 : vector<16x1xf32>
    %114 = vector.broadcast %113 : vector<16x1xf32> to vector<16x32xf32>
    %115 = arith.subf %109, %114 : vector<16x32xf32>
    %116 = arith.mulf %115, %115 : vector<16x32xf32>
    %cst_41 = arith.constant dense<0.000000e+00> : vector<16xf32>
    %117 = vector.multi_reduction <add>, %116, %cst_41 [1] : vector<16x32xf32> to vector<16xf32>
    %118 = vector.shape_cast %117 : vector<16xf32> to vector<16x1xf32>
    %cst_42 = arith.constant 3.200000e+01 : f32
    %119 = vector.broadcast %cst_42 : f32 to vector<16x1xf32>
    %120 = arith.divf %118, %119 : vector<16x1xf32>
    %121 = vector.broadcast %113 : vector<16x1xf32> to vector<16x32xf32>
    %122 = arith.subf %109, %121 : vector<16x32xf32>
    %cst_43 = arith.constant 9.99999996E-13 : f32
    %123 = vector.broadcast %cst_43 : f32 to vector<16x1xf32>
    %124 = arith.addf %120, %123 : vector<16x1xf32>
    %125 = math.rsqrt %124 : vector<16x1xf32>
    %126 = vector.broadcast %125 : vector<16x1xf32> to vector<16x32xf32>
    %127 = arith.mulf %122, %126 : vector<16x32xf32>
    %128 = vector.broadcast %11 : vector<1x32xf32> to vector<16x32xf32>
    %129 = arith.mulf %127, %128 : vector<16x32xf32>
    %130 = vector.broadcast %12 : vector<1x32xf32> to vector<16x32xf32>
    %131 = arith.addf %129, %130 : vector<16x32xf32>
    %c1 = arith.constant 1 : index
    %c0_44 = arith.constant 0 : index
    %c0_45 = arith.constant 0 : index
    %132 = vector.load %arg3[%c1, %c0_44, %c0_45] : memref<2x32x128xf32, #tpu.memory_space<vmem>>, vector<1x32x128xf32>
    %133 = vector.shape_cast %132 : vector<1x32x128xf32> to vector<32x128xf32>
    %c1_46 = arith.constant 1 : index
    %c0_47 = arith.constant 0 : index
    %c0_48 = arith.constant 0 : index
    %134 = vector.load %arg4[%c1_46, %c0_47, %c0_48] : memref<2x4x128xf32, #tpu.memory_space<vmem>>, vector<1x4x128xf32>
    %135 = vector.shape_cast %134 : vector<1x4x128xf32> to vector<4x128xf32>
    %136 = vector.extract_strided_slice %135 {offsets = [0, 0], sizes = [1, 128], strides = [1, 1]} : vector<4x128xf32> to vector<1x128xf32>
    %137 = vector.extract_strided_slice %135 {offsets = [0, 96], sizes = [1, 32], strides = [1, 1]} : vector<4x128xf32> to vector<1x32xf32>
    %138 = vector.extract_strided_slice %135 {offsets = [1, 0], sizes = [1, 128], strides = [1, 1]} : vector<4x128xf32> to vector<1x128xf32>
    %139 = vector.extract_strided_slice %135 {offsets = [2, 0], sizes = [1, 32], strides = [1, 1]} : vector<4x128xf32> to vector<1x32xf32>
    %140 = vector.extract_strided_slice %135 {offsets = [2, 32], sizes = [1, 32], strides = [1, 1]} : vector<4x128xf32> to vector<1x32xf32>
    %141 = vector.extract_strided_slice %135 {offsets = [2, 64], sizes = [1, 32], strides = [1, 1]} : vector<4x128xf32> to vector<1x32xf32>
    %142 = vector.extract_strided_slice %135 {offsets = [2, 96], sizes = [1, 32], strides = [1, 1]} : vector<4x128xf32> to vector<1x32xf32>
    %143 = vector.extract_strided_slice %135 {offsets = [3, 0], sizes = [1, 32], strides = [1, 1]} : vector<4x128xf32> to vector<1x32xf32>
    %cst_49 = arith.constant dense<0.000000e+00> : vector<16x128xf32>
    %144 = tpu.matmul %131, %133, %cst_49 {dimension_numbers = #tpu.dot_dimension_numbers<[1], [0], [0], [1], [0, 0, 1, 1], [], []>} : vector<16x32xf32>, vector<32x128xf32>, vector<16x128xf32> -> vector<16x128xf32>
    %145 = vector.broadcast %136 : vector<1x128xf32> to vector<16x128xf32>
    %146 = arith.addf %144, %145 : vector<16x128xf32>
    %147 = vector.extract_strided_slice %133 {offsets = [0, 96], sizes = [32, 32], strides = [1, 1]} : vector<32x128xf32> to vector<32x32xf32>
    %cst_50 = arith.constant 0.000000e+00 : f32
    %148 = vector.broadcast %cst_50 : f32 to vector<16x32xf32>
    %149 = vector.extract_strided_slice %146 {offsets = [0, 0], sizes = [16, 16], strides = [1, 1]} : vector<16x128xf32> to vector<16x16xf32>
    %150 = vector.extract_strided_slice %146 {offsets = [0, 32], sizes = [16, 16], strides = [1, 1]} : vector<16x128xf32> to vector<16x16xf32>
    %151 = vector.extract_strided_slice %146 {offsets = [0, 64], sizes = [16, 16], strides = [1, 1]} : vector<16x128xf32> to vector<16x16xf32>
    "tpu.trace_start"() <{level = 10 : i32, message = "qd,kd->qk"}> : () -> ()
    %cst_51 = arith.constant dense<0.000000e+00> : vector<16x16xf32>
    %152 = tpu.matmul %149, %150, %cst_51 {dimension_numbers = #tpu.dot_dimension_numbers<[1], [1], [0], [0], [0, 0, 1, 0], [], []>} : vector<16x16xf32>, vector<16x16xf32>, vector<16x16xf32> -> vector<16x16xf32>
    "tpu.trace_stop"() : () -> ()
    %cst_52 = arith.constant 2.500000e-01 : f32
    %153 = vector.broadcast %cst_52 : f32 to vector<16x16xf32>
    %154 = arith.mulf %152, %153 : vector<16x16xf32>
    %155 = arith.addf %154, %1 : vector<16x16xf32>
    %cst_53 = arith.constant dense<0xFF800000> : vector<16xf32>
    %156 = vector.multi_reduction <maximumf>, %155, %cst_53 [1] : vector<16x16xf32> to vector<16xf32>
    %157 = vector.shape_cast %156 : vector<16xf32> to vector<16x1xf32>
    %158 = vector.broadcast %157 : vector<16x1xf32> to vector<16x16xf32>
    %159 = arith.subf %155, %158 : vector<16x16xf32>
    %160 = math.exp %159 : vector<16x16xf32>
    %cst_54 = arith.constant dense<0.000000e+00> : vector<16xf32>
    %161 = vector.multi_reduction <add>, %160, %cst_54 [1] : vector<16x16xf32> to vector<16xf32>
    %162 = vector.shape_cast %161 : vector<16xf32> to vector<16x1xf32>
    %163 = tpu.reciprocal %162 {approx = true} : vector<16x1xf32> -> vector<16x1xf32>
    %164 = vector.broadcast %163 : vector<16x1xf32> to vector<16x16xf32>
    %165 = arith.mulf %160, %164 : vector<16x16xf32>
    %cst_55 = arith.constant dense<0.000000e+00> : vector<16x16xf32>
    %166 = tpu.matmul %165, %151, %cst_55 {dimension_numbers = #tpu.dot_dimension_numbers<[1], [0], [0], [1], [0, 0, 1, 1], [], []>} : vector<16x16xf32>, vector<16x16xf32>, vector<16x16xf32> -> vector<16x16xf32>
    %167 = vector.extract_strided_slice %147 {offsets = [0, 0], sizes = [16, 32], strides = [1, 1]} : vector<32x32xf32> to vector<16x32xf32>
    %cst_56 = arith.constant dense<0.000000e+00> : vector<16x32xf32>
    %168 = tpu.matmul %166, %167, %cst_56 {dimension_numbers = #tpu.dot_dimension_numbers<[1], [0], [0], [1], [0, 0, 1, 1], [], []>} : vector<16x16xf32>, vector<16x32xf32>, vector<16x32xf32> -> vector<16x32xf32>
    %169 = arith.addf %148, %168 : vector<16x32xf32>
    %170 = vector.extract_strided_slice %146 {offsets = [0, 16], sizes = [16, 16], strides = [1, 1]} : vector<16x128xf32> to vector<16x16xf32>
    %171 = vector.extract_strided_slice %146 {offsets = [0, 48], sizes = [16, 16], strides = [1, 1]} : vector<16x128xf32> to vector<16x16xf32>
    %172 = vector.extract_strided_slice %146 {offsets = [0, 80], sizes = [16, 16], strides = [1, 1]} : vector<16x128xf32> to vector<16x16xf32>
    "tpu.trace_start"() <{level = 10 : i32, message = "qd,kd->qk"}> : () -> ()
    %cst_57 = arith.constant dense<0.000000e+00> : vector<16x16xf32>
    %173 = tpu.matmul %170, %171, %cst_57 {dimension_numbers = #tpu.dot_dimension_numbers<[1], [1], [0], [0], [0, 0, 1, 0], [], []>} : vector<16x16xf32>, vector<16x16xf32>, vector<16x16xf32> -> vector<16x16xf32>
    "tpu.trace_stop"() : () -> ()
    %cst_58 = arith.constant 2.500000e-01 : f32
    %174 = vector.broadcast %cst_58 : f32 to vector<16x16xf32>
    %175 = arith.mulf %173, %174 : vector<16x16xf32>
    %176 = arith.addf %175, %1 : vector<16x16xf32>
    %cst_59 = arith.constant dense<0xFF800000> : vector<16xf32>
    %177 = vector.multi_reduction <maximumf>, %176, %cst_59 [1] : vector<16x16xf32> to vector<16xf32>
    %178 = vector.shape_cast %177 : vector<16xf32> to vector<16x1xf32>
    %179 = vector.broadcast %178 : vector<16x1xf32> to vector<16x16xf32>
    %180 = arith.subf %176, %179 : vector<16x16xf32>
    %181 = math.exp %180 : vector<16x16xf32>
    %cst_60 = arith.constant dense<0.000000e+00> : vector<16xf32>
    %182 = vector.multi_reduction <add>, %181, %cst_60 [1] : vector<16x16xf32> to vector<16xf32>
    %183 = vector.shape_cast %182 : vector<16xf32> to vector<16x1xf32>
    %184 = tpu.reciprocal %183 {approx = true} : vector<16x1xf32> -> vector<16x1xf32>
    %185 = vector.broadcast %184 : vector<16x1xf32> to vector<16x16xf32>
    %186 = arith.mulf %181, %185 : vector<16x16xf32>
    %cst_61 = arith.constant dense<0.000000e+00> : vector<16x16xf32>
    %187 = tpu.matmul %186, %172, %cst_61 {dimension_numbers = #tpu.dot_dimension_numbers<[1], [0], [0], [1], [0, 0, 1, 1], [], []>} : vector<16x16xf32>, vector<16x16xf32>, vector<16x16xf32> -> vector<16x16xf32>
    %188 = vector.extract_strided_slice %147 {offsets = [16, 0], sizes = [16, 32], strides = [1, 1]} : vector<32x32xf32> to vector<16x32xf32>
    %cst_62 = arith.constant dense<0.000000e+00> : vector<16x32xf32>
    %189 = tpu.matmul %187, %188, %cst_62 {dimension_numbers = #tpu.dot_dimension_numbers<[1], [0], [0], [1], [0, 0, 1, 1], [], []>} : vector<16x16xf32>, vector<16x32xf32>, vector<16x32xf32> -> vector<16x32xf32>
    %190 = arith.addf %169, %189 : vector<16x32xf32>
    %191 = vector.broadcast %137 : vector<1x32xf32> to vector<16x32xf32>
    %192 = arith.addf %190, %191 : vector<16x32xf32>
    %193 = arith.addf %131, %192 : vector<16x32xf32>
    %cst_63 = arith.constant dense<0.000000e+00> : vector<16xf32>
    %194 = vector.multi_reduction <add>, %193, %cst_63 [1] : vector<16x32xf32> to vector<16xf32>
    %195 = vector.shape_cast %194 : vector<16xf32> to vector<16x1xf32>
    %cst_64 = arith.constant 3.200000e+01 : f32
    %196 = vector.broadcast %cst_64 : f32 to vector<16x1xf32>
    %197 = arith.divf %195, %196 : vector<16x1xf32>
    %198 = vector.broadcast %197 : vector<16x1xf32> to vector<16x32xf32>
    %199 = arith.subf %193, %198 : vector<16x32xf32>
    %200 = arith.mulf %199, %199 : vector<16x32xf32>
    %cst_65 = arith.constant dense<0.000000e+00> : vector<16xf32>
    %201 = vector.multi_reduction <add>, %200, %cst_65 [1] : vector<16x32xf32> to vector<16xf32>
    %202 = vector.shape_cast %201 : vector<16xf32> to vector<16x1xf32>
    %cst_66 = arith.constant 3.200000e+01 : f32
    %203 = vector.broadcast %cst_66 : f32 to vector<16x1xf32>
    %204 = arith.divf %202, %203 : vector<16x1xf32>
    %205 = vector.broadcast %197 : vector<16x1xf32> to vector<16x32xf32>
    %206 = arith.subf %193, %205 : vector<16x32xf32>
    %cst_67 = arith.constant 9.99999996E-13 : f32
    %207 = vector.broadcast %cst_67 : f32 to vector<16x1xf32>
    %208 = arith.addf %204, %207 : vector<16x1xf32>
    %209 = math.rsqrt %208 : vector<16x1xf32>
    %210 = vector.broadcast %209 : vector<16x1xf32> to vector<16x32xf32>
    %211 = arith.mulf %206, %210 : vector<16x32xf32>
    %212 = vector.broadcast %139 : vector<1x32xf32> to vector<16x32xf32>
    %213 = arith.mulf %211, %212 : vector<16x32xf32>
    %214 = vector.broadcast %140 : vector<1x32xf32> to vector<16x32xf32>
    %215 = arith.addf %213, %214 : vector<16x32xf32>
    %c1_68 = arith.constant 1 : index
    %c0_69 = arith.constant 0 : index
    %c0_70 = arith.constant 0 : index
    %216 = vector.load %arg5[%c1_68, %c0_69, %c0_70] : memref<2x32x128xf32, #tpu.memory_space<vmem>>, vector<1x32x128xf32>
    %217 = vector.shape_cast %216 : vector<1x32x128xf32> to vector<32x128xf32>
    %cst_71 = arith.constant dense<0.000000e+00> : vector<16x128xf32>
    %218 = tpu.matmul %215, %217, %cst_71 {dimension_numbers = #tpu.dot_dimension_numbers<[1], [0], [0], [1], [0, 0, 1, 1], [], []>} : vector<16x32xf32>, vector<32x128xf32>, vector<16x128xf32> -> vector<16x128xf32>
    %219 = vector.broadcast %138 : vector<1x128xf32> to vector<16x128xf32>
    %220 = arith.addf %218, %219 : vector<16x128xf32>
    %cst_72 = arith.constant 5.000000e-01 : f32
    %221 = vector.broadcast %cst_72 : f32 to vector<16x128xf32>
    %222 = arith.mulf %221, %220 : vector<16x128xf32>
    %cst_73 = arith.constant 4.471500e-02 : f32
    %223 = vector.broadcast %cst_73 : f32 to vector<16x128xf32>
    %224 = arith.mulf %223, %220 : vector<16x128xf32>
    %225 = arith.mulf %224, %220 : vector<16x128xf32>
    %226 = arith.mulf %225, %220 : vector<16x128xf32>
    %227 = arith.addf %220, %226 : vector<16x128xf32>
    %cst_74 = arith.constant 0.797884583 : f32
    %228 = vector.broadcast %cst_74 : f32 to vector<16x128xf32>
    %229 = arith.mulf %228, %227 : vector<16x128xf32>
    %230 = math.tanh %229 : vector<16x128xf32>
    %cst_75 = arith.constant 1.000000e+00 : f32
    %231 = vector.broadcast %cst_75 : f32 to vector<16x128xf32>
    %232 = arith.addf %231, %230 : vector<16x128xf32>
    %233 = arith.mulf %222, %232 : vector<16x128xf32>
    %c1_76 = arith.constant 1 : index
    %c0_77 = arith.constant 0 : index
    %c0_78 = arith.constant 0 : index
    %234 = vector.load %arg6[%c1_76, %c0_77, %c0_78] : memref<2x128x32xf32, #tpu.memory_space<vmem>>, vector<1x128x32xf32>
    %235 = vector.shape_cast %234 : vector<1x128x32xf32> to vector<128x32xf32>
    %cst_79 = arith.constant dense<0.000000e+00> : vector<16x32xf32>
    %236 = tpu.matmul %233, %235, %cst_79 {dimension_numbers = #tpu.dot_dimension_numbers<[1], [0], [0], [1], [0, 0, 1, 1], [], []>} : vector<16x128xf32>, vector<128x32xf32>, vector<16x32xf32> -> vector<16x32xf32>
    %237 = vector.broadcast %143 : vector<1x32xf32> to vector<16x32xf32>
    %238 = arith.addf %236, %237 : vector<16x32xf32>
    %239 = arith.addf %215, %238 : vector<16x32xf32>
    %cst_80 = arith.constant dense<0.000000e+00> : vector<16xf32>
    %240 = vector.multi_reduction <add>, %239, %cst_80 [1] : vector<16x32xf32> to vector<16xf32>
    %241 = vector.shape_cast %240 : vector<16xf32> to vector<16x1xf32>
    %cst_81 = arith.constant 3.200000e+01 : f32
    %242 = vector.broadcast %cst_81 : f32 to vector<16x1xf32>
    %243 = arith.divf %241, %242 : vector<16x1xf32>
    %244 = vector.broadcast %243 : vector<16x1xf32> to vector<16x32xf32>
    %245 = arith.subf %239, %244 : vector<16x32xf32>
    %246 = arith.mulf %245, %245 : vector<16x32xf32>
    %cst_82 = arith.constant dense<0.000000e+00> : vector<16xf32>
    %247 = vector.multi_reduction <add>, %246, %cst_82 [1] : vector<16x32xf32> to vector<16xf32>
    %248 = vector.shape_cast %247 : vector<16xf32> to vector<16x1xf32>
    %cst_83 = arith.constant 3.200000e+01 : f32
    %249 = vector.broadcast %cst_83 : f32 to vector<16x1xf32>
    %250 = arith.divf %248, %249 : vector<16x1xf32>
    %251 = vector.broadcast %243 : vector<16x1xf32> to vector<16x32xf32>
    %252 = arith.subf %239, %251 : vector<16x32xf32>
    %cst_84 = arith.constant 9.99999996E-13 : f32
    %253 = vector.broadcast %cst_84 : f32 to vector<16x1xf32>
    %254 = arith.addf %250, %253 : vector<16x1xf32>
    %255 = math.rsqrt %254 : vector<16x1xf32>
    %256 = vector.broadcast %255 : vector<16x1xf32> to vector<16x32xf32>
    %257 = arith.mulf %252, %256 : vector<16x32xf32>
    %258 = vector.broadcast %141 : vector<1x32xf32> to vector<16x32xf32>
    %259 = arith.mulf %257, %258 : vector<16x32xf32>
    %260 = vector.broadcast %142 : vector<1x32xf32> to vector<16x32xf32>
    %261 = arith.addf %259, %260 : vector<16x32xf32>
    %c0_85 = arith.constant 0 : index
    %c0_86 = arith.constant 0 : index
    %262 = vector.load %arg2[%c0_85, %c0_86] : memref<2x16xf32, #tpu.memory_space<vmem>>, vector<2x16xf32>
    %cst_87 = arith.constant dense<0.000000e+00> : vector<2x32xf32>
    %263 = tpu.matmul %262, %261, %cst_87 {dimension_numbers = #tpu.dot_dimension_numbers<[1], [0], [0], [1], [0, 0, 1, 1], [], []>} : vector<2x16xf32>, vector<16x32xf32>, vector<2x32xf32> -> vector<2x32xf32>
    %c0_88 = arith.constant 0 : index
    %c0_89 = arith.constant 0 : index
    %264 = vector.load %arg7[%c0_88, %c0_89] : memref<32x3xf32, #tpu.memory_space<vmem>>, vector<32x3xf32>
    %cst_90 = arith.constant dense<0.000000e+00> : vector<2x3xf32>
    %265 = tpu.matmul %263, %264, %cst_90 {dimension_numbers = #tpu.dot_dimension_numbers<[1], [0], [0], [1], [0, 0, 1, 1], [], []>} : vector<2x32xf32>, vector<32x3xf32>, vector<2x3xf32> -> vector<2x3xf32>
    %c0_91 = arith.constant 0 : index
    %c0_92 = arith.constant 0 : index
    %266 = vector.load %arg8[%c0_91, %c0_92] : memref<1x3xf32, #tpu.memory_space<vmem>>, vector<1x3xf32>
    %267 = vector.broadcast %266 : vector<1x3xf32> to vector<2x3xf32>
    %268 = arith.addf %265, %267 : vector<2x3xf32>
    %c0_93 = arith.constant 0 : index
    %c0_94 = arith.constant 0 : index
    %269 = vector.load %arg9[%c0_93, %c0_94] : memref<2x3xf32, #tpu.memory_space<vmem>>, vector<2x3xf32>
    tpu.vector_store %arg9[%c0_93, %c0_94], %268 {strides = array<i32>} : memref<2x3xf32, #tpu.memory_space<vmem>>, vector<2x3xf32>,
    return
  }
}

</mosaic_0001>

<llo_original>
// kernel: bert_forward.1
$region0: #{bert_forward.1}
  #allocation0 [shape = 'u32[]', space=smem, size = 0x4, offset = 0x4, fixed_abs, tag = 'smem constant byte address 0x4 - core index']
  #allocation1 [shape = 'u32[144,128]{1,0:T(1,128)}', space=vmem, size = 0x12000, scoped, tag = 'internal scratch']
  %s0 = inlined_call_operand.vmem [shape: f32[16,32], index: 0, kind: input, shape index: {}]
  %s1 = inlined_call_operand.vmem [shape: f32[16,16], index: 1, kind: input, shape index: {}]
  %s2 = inlined_call_operand.vmem [shape: f32[2,16], index: 2, kind: input, shape index: {}]
  %s3 = inlined_call_operand.vmem [shape: f32[2,32,128], index: 3, kind: input, shape index: {}]
  %s4 = inlined_call_operand.vmem [shape: f32[2,4,128], index: 4, kind: input, shape index: {}]
  %s5 = inlined_call_operand.vmem [shape: f32[2,32,128], index: 5, kind: input, shape index: {}]
  %s6 = inlined_call_operand.vmem [shape: f32[2,128,32], index: 6, kind: input, shape index: {}]
  %s7 = inlined_call_operand.vmem [shape: f32[32,3], index: 7, kind: input, shape index: {}]
  %s8 = inlined_call_operand.vmem [shape: f32[1,3], index: 8, kind: input, shape index: {}]
  %s9 = inlined_call_operand.vmem [shape: f32[2,3], index: 9, kind: output, shape index: {}]
  %s10 = sld [smem:[#allocation0]]
  $region46: #{bert_forward.1} parent=0
    _
  %s12 = ssub.s32 1, %s10
  %s13 = scalar_select 0, %s12, %s10
  // Predicated region
  $region2: #{bert_forward.1} parent=0 // pred_check
    _
  $region3: #{bert_forward.1} parent=0 // pred_check_branch
    %15 = sbr.rel (0) target = $region5
  $region4: #{bert_forward.1} parent=0 // pred_region
    _
  $region5: #{bert_forward.1} parent=0 // pred_fallthru
    _
  // Predicated region
  $region6: #{bert_forward.1} parent=0 // pred_check
    _
  $region7: #{bert_forward.1} parent=0 // pred_check_branch
    %17 = sbr.rel (0) target = $region9
  $region8: #{bert_forward.1} parent=0 // pred_region
    _
  $region9: #{bert_forward.1} parent=0 // pred_fallthru
    _
  // Predicated region
  $region10: #{bert_forward.1} parent=0 // pred_check
    _
  $region11: #{bert_forward.1} parent=0 // pred_check_branch
    %19 = sbr.rel (0) target = $region13
  $region12: #{bert_forward.1} parent=0 // pred_region
    _
  $region13: #{bert_forward.1} parent=0 // pred_fallthru
    _
  // Predicated region
  $region14: #{bert_forward.1} parent=0 // pred_check
    _
  $region15: #{bert_forward.1} parent=0 // pred_check_branch
    %21 = sbr.rel (0) target = $region17
  $region16: #{bert_forward.1} parent=0 // pred_region
    _
  $region17: #{bert_forward.1} parent=0 // pred_fallthru
    _
  // Predicated region
  $region18: #{bert_forward.1} parent=0 // pred_check
    _
  $region19: #{bert_forward.1} parent=0 // pred_check_branch
    %23 = sbr.rel (0) target = $region21
  $region20: #{bert_forward.1} parent=0 // pred_region
    _
  $region21: #{bert_forward.1} parent=0 // pred_fallthru
    _
  // Predicated region
  $region22: #{bert_forward.1} parent=0 // pred_check
    _
  $region23: #{bert_forward.1} parent=0 // pred_check_branch
    %25 = sbr.rel (0) target = $region25
  $region24: #{bert_forward.1} parent=0 // pred_region
    _
  $region25: #{bert_forward.1} parent=0 // pred_fallthru
    _
  // Predicated region
  $region26: #{bert_forward.1} parent=0 // pred_check
    _
  $region27: #{bert_forward.1} parent=0 // pred_check_branch
    %27 = sbr.rel (0) target = $region29
  $region28: #{bert_forward.1} parent=0 // pred_region
    _
  $region29: #{bert_forward.1} parent=0 // pred_fallthru
    _
  // Predicated region
  $region30: #{bert_forward.1} parent=0 // pred_check
    _
  $region31: #{bert_forward.1} parent=0 // pred_check_branch
    %29 = sbr.rel (0) target = $region33
  $region32: #{bert_forward.1} parent=0 // pred_region
    _
  $region33: #{bert_forward.1} parent=0 // pred_fallthru
    _
  // Predicated region
  $region34: #{bert_forward.1} parent=0 // pred_check
    _
  $region35: #{bert_forward.1} parent=0 // pred_check_branch
    %31 = sbr.rel (0) target = $region37
  $region36: #{bert_forward.1} parent=0 // pred_region
    _
  $region37: #{bert_forward.1} parent=0 // pred_fallthru
    _
  %v32 = vld [vmem:[%s0] sm:$0xff]
  %v33 = vld [vmem:[%s0 + $0x8] sm:$0xff]
  %v34 = vld [vmem:[%s1] sm:$0xff]
  %v35 = vld [vmem:[%s1 + $0x8] sm:$0xff]
  %v36 = vld [vmem:[%s3] sm:$0xff]
  %v37 = vld [vmem:[%s3 + $0x8] sm:$0xff]
  %v38 = vld [vmem:[%s3 + $0x10] sm:$0xff]
  %v39 = vld [vmem:[%s3 + $0x18] sm:$0xff]
  %v40 = vld [vmem:[%s4] sm:$0xf]
  %v41 = vlaneseq
  %v42 = vshrl.u32 %v41, 7
  %v43 = vsub.s32 0, %v42
  %v44 = vrot.slane %v40, %v43
  %vm45 = vcmask 261120
  %v47 = vsel %vm45, %v32, 0
  %v50 = vsel %vm45, %v33, 0
  %52 = vmatprep.subr.mxu0 0.0
  %53 = vmatpush1.msra.mxu0 %v36
  %54 = vmatprep.subr.mxu0 0.0
  %55 = vmatpush1.msra.mxu0 %v37
  %56 = vmatprep.subr.mxu0 0.0
  %57 = vmatpush1.msra.mxu0 %v38
  %58 = vmatprep.subr.mxu0 0.0
  %59 = vmatpush1.msra.mxu0 %v39
  %60 = vmatprep.subr.mxu0 0.0
  %61 = vmatpush1.msra.mxu0 0.0
  %62 = vmatprep.subr.mxu0 0.0
  %63 = vmatpush1.msra.mxu0 0.0
  %64 = vmatprep.subr.mxu0 0.0
  %65 = vmatpush1.msra.mxu0 0.0
  %66 = vmatprep.subr.mxu0 0.0
  %67 = vmatpush1.msra.mxu0 0.0
  %68 = vmatprep.subr.mxu0 0.0
  %69 = vmatpush1.msra.mxu0 0.0
  %70 = vmatprep.subr.mxu0 0.0
  %71 = vmatpush1.msra.mxu0 0.0
  %72 = vmatprep.subr.mxu0 0.0
  %73 = vmatpush1.msra.mxu0 0.0
  %74 = vmatprep.subr.mxu0 0.0
  %75 = vmatpush1.msra.mxu0 0.0
  %76 = vmatprep.subr.mxu0 0.0
  %77 = vmatpush1.msra.mxu0 0.0
  %78 = vmatprep.subr.mxu0 0.0
  %79 = vmatpush1.msra.mxu0 0.0
  %80 = vmatprep.subr.mxu0 0.0
  %81 = vmatpush1.msra.mxu0 0.0
  %82 = vmatprep.subr.mxu0 0.0
  %83 = vmatpush1.msra.mxu0 0.0
  %84 = vmatprep.subr.mxu0 0.0
  %85 = vmatpush1.msra.mxu0 0.0
  %86 = vmatprep.subr.mxu0 0.0
  %87 = vmatpush1.msra.mxu0 0.0
  %88 = vmatprep.subr.mxu0 0.0
  %89 = vmatpush1.msra.mxu0 0.0
  %90 = vmatprep.subr.mxu0 0.0
  %91 = vmatpush1.msra.mxu0 0.0
  %92 = vmatprep.subr.mxu0 0.0
  %93 = vmatpush1.msra.mxu0 0.0
  %94 = vmatprep.subr.mxu0 0.0
  %95 = vmatpush1.msra.mxu0 0.0
  %96 = vmatprep.subr.mxu0 0.0
  %97 = vmatpush1.msra.mxu0 0.0
  %98 = vmatprep.subr.mxu0 0.0
  %99 = vmatpush1.msra.mxu0 0.0
  %100 = vmatprep.subr.mxu0 0.0
  %101 = vmatpush1.msra.mxu0 0.0
  %102 = vmatprep.subr.mxu0 0.0
  %103 = vmatpush1.msra.mxu0 0.0
  %104 = vmatprep.subr.mxu0 0.0
  %105 = vmatpush1.msra.mxu0 0.0
  %106 = vmatprep.subr.mxu0 0.0
  %107 = vmatpush1.msra.mxu0 0.0
  %108 = vmatprep.subr.mxu0 0.0
  %109 = vmatpush1.msra.mxu0 0.0
  %110 = vmatprep.subr.mxu0 0.0
  %111 = vmatpush1.msra.mxu0 0.0
  %112 = vmatprep.subr.mxu0 0.0
  %113 = vmatpush1.msra.mxu0 0.0
  %114 = vmatprep.subr.mxu0 0.0
  %115 = vmatpush1.msra.mxu0 0.0
  %116 = vmatprep.mubr.f32.mxu0 0.0
  %117 = vmatmul.mubr.f32.gmra.mrb[0].mxu0 %v47
  %v118 = vpop.f32.mrb[0].mxu0
  %v119 = vadd.f32 %v44, %v118
  %v120 = vpop.f32.mrb[0].mxu0
  %121 = vmatprep.mubr.f32.mxu0 0.0
  %122 = vmatmul.mubr.f32.gmra.mrb[0].mxu0 %v50
  %v123 = vpop.f32.mrb[0].mxu0
  %v124 = vadd.f32 %v44, %v123
  %v125 = vpop.f32.mrb[0].mxu0
  %126 = vdwg.mxu0
  %129 = vrot.lane.b32.xlu0 %v119, 96
  %v130 = vpop.permute.xlu0 %129
  %131 = vrot.lane.b32.xlu0 %v124, 96
  %v132 = vpop.permute.xlu0 %131
  %vm133 = vcmask 130048
  %v134 = vsel %vm133, %v119, 0
  %v136 = vsel %vm133, %v124, 0
  %v138 = vsel %vm133, %v130, 0
  %v140 = vsel %vm133, %v132, 0
  %142 = vmatprep.subr.mxu0 0.0
  %143 = vmatpush1.xpose.msra.mxu0 %v138
  %144 = vmatprep.subr.mxu0 0.0
  %145 = vmatpush1.xpose.msra.mxu0 %v140
  %146 = vmatprep.subr.mxu0 0.0
  %147 = vmatpush1.xpose.msra.mxu0 0.0
  %148 = vmatprep.subr.mxu0 0.0
  %149 = vmatpush1.xpose.msra.mxu0 0.0
  %150 = vmatprep.subr.mxu0 0.0
  %151 = vmatpush1.xpose.msra.mxu0 0.0
  %152 = vmatprep.subr.mxu0 0.0
  %153 = vmatpush1.xpose.msra.mxu0 0.0
  %154 = vmatprep.subr.mxu0 0.0
  %155 = vmatpush1.xpose.msra.mxu0 0.0
  %156 = vmatprep.subr.mxu0 0.0
  %157 = vmatpush1.xpose.msra.mxu0 0.0
  %158 = vmatprep.subr.mxu0 0.0
  %159 = vmatpush1.xpose.msra.mxu0 0.0
  %160 = vmatprep.subr.mxu0 0.0
  %161 = vmatpush1.xpose.msra.mxu0 0.0
  %162 = vmatprep.subr.mxu0 0.0
  %163 = vmatpush1.xpose.msra.mxu0 0.0
  %164 = vmatprep.subr.mxu0 0.0
  %165 = vmatpush1.xpose.msra.mxu0 0.0
  %166 = vmatprep.subr.mxu0 0.0
  %167 = vmatpush1.xpose.msra.mxu0 0.0
  %168 = vmatprep.subr.mxu0 0.0
  %169 = vmatpush1.xpose.msra.mxu0 0.0
  %170 = vmatprep.subr.mxu0 0.0
  %171 = vmatpush1.xpose.msra.mxu0 0.0
  %172 = vmatprep.subr.mxu0 0.0
  %173 = vmatpush1.xpose.msra.mxu0 0.0
  %174 = vmatprep.subr.mxu0 0.0
  %175 = vmatpush1.xpose.msra.mxu0 0.0
  %176 = vmatprep.subr.mxu0 0.0
  %177 = vmatpush1.xpose.msra.mxu0 0.0
  %178 = vmatprep.subr.mxu0 0.0
  %179 = vmatpush1.xpose.msra.mxu0 0.0
  %180 = vmatprep.subr.mxu0 0.0
  %181 = vmatpush1.xpose.msra.mxu0 0.0
  %182 = vmatprep.subr.mxu0 0.0
  %183 = vmatpush1.xpose.msra.mxu0 0.0
  %184 = vmatprep.subr.mxu0 0.0
  %185 = vmatpush1.xpose.msra.mxu0 0.0
  %186 = vmatprep.subr.mxu0 0.0
  %187 = vmatpush1.xpose.msra.mxu0 0.0
  %188 = vmatprep.subr.mxu0 0.0
  %189 = vmatpush1.xpose.msra.mxu0 0.0
  %190 = vmatprep.subr.mxu0 0.0
  %191 = vmatpush1.xpose.msra.mxu0 0.0
  %192 = vmatprep.subr.mxu0 0.0
  %193 = vmatpush1.xpose.msra.mxu0 0.0
  %194 = vmatprep.subr.mxu0 0.0
  %195 = vmatpush1.xpose.msra.mxu0 0.0
  %196 = vmatprep.subr.mxu0 0.0
  %197 = vmatpush1.xpose.msra.mxu0 0.0
  %198 = vmatprep.subr.mxu0 0.0
  %199 = vmatpush1.xpose.msra.mxu0 0.0
  %200 = vmatprep.subr.mxu0 0.0
  %201 = vmatpush1.xpose.msra.mxu0 0.0
  %202 = vmatprep.subr.mxu0 0.0
  %203 = vmatpush1.xpose.msra.mxu0 0.0
  %204 = vmatprep.subr.mxu0 0.0
  %205 = vmatpush1.xpose.msra.mxu0 0.0
  %206 = vmatprep.mubr.f32.mxu0 0.0
  %207 = vmatmul.mubr.f32.gmra.mrb[0].mxu0 %v134
  %v208 = vpop.f32.mrb[0].mxu0
  %v209 = vadd.f32 0.0, %v208
  %v210 = vpop.f32.mrb[0].mxu0
  %211 = vmatprep.mubr.f32.mxu0 0.0
  %212 = vmatmul.mubr.f32.gmra.mrb[0].mxu0 %v136
  %v213 = vpop.f32.mrb[0].mxu0
  %v214 = vadd.f32 0.0, %v213
  %v215 = vpop.f32.mrb[0].mxu0
  %216 = vdwg.mxu0
  %v217 = vmul.f32 %v209, 0.25
  %v218 = vmul.f32 %v214, 0.25
  %v219 = vadd.f32 %v217, %v34
  %v220 = vadd.f32 %v218, %v35
  %v221 = vsel %vm133, %v219, -inf
  %222 = vmax.xlane.f32.xlu0 %v221
  %v223 = vpop.xlane.xlu0 %222
  %v224 = vsel %vm133, %v220, -inf
  %225 = vmax.xlane.f32.xlu0 %v224
  %v226 = vpop.xlane.xlu0 %225
  %v227 = vsub.f32 %v219, %v223
  %v228 = vsub.f32 %v220, %v226
  %v229 = vmul.f32 %v227, 1.442695
  %v230 = vpow.pop %v229
  %v231 = vmul.f32 %v228, 1.442695
  %v232 = vpow.pop %v231
  %v233 = vsel %vm133, %v230, 0.0
  %234 = vadd.xlane.f32.xlu0 %v233
  %v235 = vpop.xlane.xlu0 %234
  %v236 = vsel %vm133, %v232, 0.0
  %237 = vadd.xlane.f32.xlu0 %v236
  %v238 = vpop.xlane.xlu0 %237
  %v239 = vrcp.pop %v235
  %v240 = vrcp.pop %v238
  %v241 = vmul.f32 %v230, %v239
  %v242 = vmul.f32 %v232, %v240
  %243 = vrot.lane.b32.xlu0 %v119, 64
  %v244 = vpop.permute.xlu0 %243
  %245 = vrot.lane.b32.xlu0 %v124, 64
  %v246 = vpop.permute.xlu0 %245
  %v250 = vsel %vm133, %v241, 0
  %v253 = vsel %vm133, %v242, 0
  %255 = vmatprep.subr.mxu0 0.0
  %256 = vmatpush1.msra.mxu0 %v244
  %257 = vmatprep.subr.mxu0 0.0
  %258 = vmatpush1.msra.mxu0 %v246
  %259 = vmatprep.subr.mxu0 0.0
  %260 = vmatpush1.msra.mxu0 0.0
  %261 = vmatprep.subr.mxu0 0.0
  %262 = vmatpush1.msra.mxu0 0.0
  %263 = vmatprep.subr.mxu0 0.0
  %264 = vmatpush1.msra.mxu0 0.0
  %265 = vmatprep.subr.mxu0 0.0
  %266 = vmatpush1.msra.mxu0 0.0
  %267 = vmatprep.subr.mxu0 0.0
  %268 = vmatpush1.msra.mxu0 0.0
  %269 = vmatprep.subr.mxu0 0.0
  %270 = vmatpush1.msra.mxu0 0.0
  %271 = vmatprep.subr.mxu0 0.0
  %272 = vmatpush1.msra.mxu0 0.0
  %273 = vmatprep.subr.mxu0 0.0
  %274 = vmatpush1.msra.mxu0 0.0
  %275 = vmatprep.subr.mxu0 0.0
  %276 = vmatpush1.msra.mxu0 0.0
  %277 = vmatprep.subr.mxu0 0.0
  %278 = vmatpush1.msra.mxu0 0.0
  %279 = vmatprep.subr.mxu0 0.0
  %280 = vmatpush1.msra.mxu0 0.0
  %281 = vmatprep.subr.mxu0 0.0
  %282 = vmatpush1.msra.mxu0 0.0
  %283 = vmatprep.subr.mxu0 0.0
  %284 = vmatpush1.msra.mxu0 0.0
  %285 = vmatprep.subr.mxu0 0.0
  %286 = vmatpush1.msra.mxu0 0.0
  %287 = vmatprep.subr.mxu0 0.0
  %288 = vmatpush1.msra.mxu0 0.0
  %289 = vmatprep.subr.mxu0 0.0
  %290 = vmatpush1.msra.mxu0 0.0
  %291 = vmatprep.subr.mxu0 0.0
  %292 = vmatpush1.msra.mxu0 0.0
  %293 = vmatprep.subr.mxu0 0.0
  %294 = vmatpush1.msra.mxu0 0.0
  %295 = vmatprep.subr.mxu0 0.0
  %296 = vmatpush1.msra.mxu0 0.0
  %297 = vmatprep.subr.mxu0 0.0
  %298 = vmatpush1.msra.mxu0 0.0
  %299 = vmatprep.subr.mxu0 0.0
  %300 = vmatpush1.msra.mxu0 0.0
  %301 = vmatprep.subr.mxu0 0.0
  %302 = vmatpush1.msra.mxu0 0.0
  %303 = vmatprep.subr.mxu0 0.0
  %304 = vmatpush1.msra.mxu0 0.0
  %305 = vmatprep.subr.mxu0 0.0
  %306 = vmatpush1.msra.mxu0 0.0
  %307 = vmatprep.subr.mxu0 0.0
  %308 = vmatpush1.msra.mxu0 0.0
  %309 = vmatprep.subr.mxu0 0.0
  %310 = vmatpush1.msra.mxu0 0.0
  %311 = vmatprep.subr.mxu0 0.0
  %312 = vmatpush1.msra.mxu0 0.0
  %313 = vmatprep.subr.mxu0 0.0
  %314 = vmatpush1.msra.mxu0 0.0
  %315 = vmatprep.subr.mxu0 0.0
  %316 = vmatpush1.msra.mxu0 0.0
  %317 = vmatprep.subr.mxu0 0.0
  %318 = vmatpush1.msra.mxu0 0.0
  %319 = vmatprep.mubr.f32.mxu0 0.0
  %320 = vmatmul.mubr.f32.gmra.mrb[0].mxu0 %v250
  %v321 = vpop.f32.mrb[0].mxu0
  %v322 = vadd.f32 0.0, %v321
  %v323 = vpop.f32.mrb[0].mxu0
  %324 = vmatprep.mubr.f32.mxu0 0.0
  %325 = vmatmul.mubr.f32.gmra.mrb[0].mxu0 %v253
  %v326 = vpop.f32.mrb[0].mxu0
  %v327 = vadd.f32 0.0, %v326
  %v328 = vpop.f32.mrb[0].mxu0
  %329 = vdwg.mxu0
  %330 = vrot.lane.b32.xlu0 %v119, 112
  %v331 = vpop.permute.xlu0 %330
  %332 = vrot.lane.b32.xlu0 %v124, 112
  %v333 = vpop.permute.xlu0 %332
  %334 = vrot.lane.b32.xlu0 %v119, 80
  %v335 = vpop.permute.xlu0 %334
  %336 = vrot.lane.b32.xlu0 %v124, 80
  %v337 = vpop.permute.xlu0 %336
  %v338 = vsel %vm133, %v331, 0
  %v340 = vsel %vm133, %v333, 0
  %v342 = vsel %vm133, %v335, 0
  %v344 = vsel %vm133, %v337, 0
  %346 = vmatprep.subr.mxu0 0.0
  %347 = vmatpush1.xpose.msra.mxu0 %v342
  %348 = vmatprep.subr.mxu0 0.0
  %349 = vmatpush1.xpose.msra.mxu0 %v344
  %350 = vmatprep.subr.mxu0 0.0
  %351 = vmatpush1.xpose.msra.mxu0 0.0
  %352 = vmatprep.subr.mxu0 0.0
  %353 = vmatpush1.xpose.msra.mxu0 0.0
  %354 = vmatprep.subr.mxu0 0.0
  %355 = vmatpush1.xpose.msra.mxu0 0.0
  %356 = vmatprep.subr.mxu0 0.0
  %357 = vmatpush1.xpose.msra.mxu0 0.0
  %358 = vmatprep.subr.mxu0 0.0
  %359 = vmatpush1.xpose.msra.mxu0 0.0
  %360 = vmatprep.subr.mxu0 0.0
  %361 = vmatpush1.xpose.msra.mxu0 0.0
  %362 = vmatprep.subr.mxu0 0.0
  %363 = vmatpush1.xpose.msra.mxu0 0.0
  %364 = vmatprep.subr.mxu0 0.0
  %365 = vmatpush1.xpose.msra.mxu0 0.0
  %366 = vmatprep.subr.mxu0 0.0
  %367 = vmatpush1.xpose.msra.mxu0 0.0
  %368 = vmatprep.subr.mxu0 0.0
  %369 = vmatpush1.xpose.msra.mxu0 0.0
  %370 = vmatprep.subr.mxu0 0.0
  %371 = vmatpush1.xpose.msra.mxu0 0.0
  %372 = vmatprep.subr.mxu0 0.0
  %373 = vmatpush1.xpose.msra.mxu0 0.0
  %374 = vmatprep.subr.mxu0 0.0
  %375 = vmatpush1.xpose.msra.mxu0 0.0
  %376 = vmatprep.subr.mxu0 0.0
  %377 = vmatpush1.xpose.msra.mxu0 0.0
  %378 = vmatprep.subr.mxu0 0.0
  %379 = vmatpush1.xpose.msra.mxu0 0.0
  %380 = vmatprep.subr.mxu0 0.0
  %381 = vmatpush1.xpose.msra.mxu0 0.0
  %382 = vmatprep.subr.mxu0 0.0
  %383 = vmatpush1.xpose.msra.mxu0 0.0
  %384 = vmatprep.subr.mxu0 0.0
  %385 = vmatpush1.xpose.msra.mxu0 0.0
  %386 = vmatprep.subr.mxu0 0.0
  %387 = vmatpush1.xpose.msra.mxu0 0.0
  %388 = vmatprep.subr.mxu0 0.0
  %389 = vmatpush1.xpose.msra.mxu0 0.0
  %390 = vmatprep.subr.mxu0 0.0
  %391 = vmatpush1.xpose.msra.mxu0 0.0
  %392 = vmatprep.subr.mxu0 0.0
  %393 = vmatpush1.xpose.msra.mxu0 0.0
  %394 = vmatprep.subr.mxu0 0.0
  %395 = vmatpush1.xpose.msra.mxu0 0.0
  %396 = vmatprep.subr.mxu0 0.0
  %397 = vmatpush1.xpose.msra.mxu0 0.0
  %398 = vmatprep.subr.mxu0 0.0
  %399 = vmatpush1.xpose.msra.mxu0 0.0
  %400 = vmatprep.subr.mxu0 0.0
  %401 = vmatpush1.xpose.msra.mxu0 0.0
  %402 = vmatprep.subr.mxu0 0.0
  %403 = vmatpush1.xpose.msra.mxu0 0.0
  %404 = vmatprep.subr.mxu0 0.0
  %405 = vmatpush1.xpose.msra.mxu0 0.0
  %406 = vmatprep.subr.mxu0 0.0
  %407 = vmatpush1.xpose.msra.mxu0 0.0
  %408 = vmatprep.subr.mxu0 0.0
  %409 = vmatpush1.xpose.msra.mxu0 0.0
  %410 = vmatprep.mubr.f32.mxu0 0.0
  %411 = vmatmul.mubr.f32.gmra.mrb[0].mxu0 %v338
  %v412 = vpop.f32.mrb[0].mxu0
  %v413 = vadd.f32 0.0, %v412
  %v414 = vpop.f32.mrb[0].mxu0
  %415 = vmatprep.mubr.f32.mxu0 0.0
  %416 = vmatmul.mubr.f32.gmra.mrb[0].mxu0 %v340
  %v417 = vpop.f32.mrb[0].mxu0
  %v418 = vadd.f32 0.0, %v417
  %v419 = vpop.f32.mrb[0].mxu0
  %420 = vdwg.mxu0
  %v421 = vmul.f32 %v413, 0.25
  %v422 = vmul.f32 %v418, 0.25
  %v423 = vadd.f32 %v421, %v34
  %v424 = vadd.f32 %v422, %v35
  %v425 = vsel %vm133, %v423, -inf
  %426 = vmax.xlane.f32.xlu0 %v425
  %v427 = vpop.xlane.xlu0 %426
  %v428 = vsel %vm133, %v424, -inf
  %429 = vmax.xlane.f32.xlu0 %v428
  %v430 = vpop.xlane.xlu0 %429
  %v431 = vsub.f32 %v423, %v427
  %v432 = vsub.f32 %v424, %v430
  %v433 = vmul.f32 %v431, 1.442695
  %v434 = vpow.pop %v433
  %v435 = vmul.f32 %v432, 1.442695
  %v436 = vpow.pop %v435
  %v437 = vsel %vm133, %v434, 0.0
  %438 = vadd.xlane.f32.xlu0 %v437
  %v439 = vpop.xlane.xlu0 %438
  %v440 = vsel %vm133, %v436, 0.0
  %441 = vadd.xlane.f32.xlu0 %v440
  %v442 = vpop.xlane.xlu0 %441
  %v443 = vrcp.pop %v439
  %v444 = vrcp.pop %v442
  %v445 = vmul.f32 %v434, %v443
  %v446 = vmul.f32 %v436, %v444
  %447 = vrot.lane.b32.xlu0 %v119, 48
  %v448 = vpop.permute.xlu0 %447
  %449 = vrot.lane.b32.xlu0 %v124, 48
  %v450 = vpop.permute.xlu0 %449
  %v454 = vsel %vm133, %v445, 0
  %v457 = vsel %vm133, %v446, 0
  %459 = vmatprep.subr.mxu0 0.0
  %460 = vmatpush1.msra.mxu0 %v448
  %461 = vmatprep.subr.mxu0 0.0
  %462 = vmatpush1.msra.mxu0 %v450
  %463 = vmatprep.subr.mxu0 0.0
  %464 = vmatpush1.msra.mxu0 0.0
  %465 = vmatprep.subr.mxu0 0.0
  %466 = vmatpush1.msra.mxu0 0.0
  %467 = vmatprep.subr.mxu0 0.0
  %468 = vmatpush1.msra.mxu0 0.0
  %469 = vmatprep.subr.mxu0 0.0
  %470 = vmatpush1.msra.mxu0 0.0
  %471 = vmatprep.subr.mxu0 0.0
  %472 = vmatpush1.msra.mxu0 0.0
  %473 = vmatprep.subr.mxu0 0.0
  %474 = vmatpush1.msra.mxu0 0.0
  %475 = vmatprep.subr.mxu0 0.0
  %476 = vmatpush1.msra.mxu0 0.0
  %477 = vmatprep.subr.mxu0 0.0
  %478 = vmatpush1.msra.mxu0 0.0
  %479 = vmatprep.subr.mxu0 0.0
  %480 = vmatpush1.msra.mxu0 0.0
  %481 = vmatprep.subr.mxu0 0.0
  %482 = vmatpush1.msra.mxu0 0.0
  %483 = vmatprep.subr.mxu0 0.0
  %484 = vmatpush1.msra.mxu0 0.0
  %485 = vmatprep.subr.mxu0 0.0
  %486 = vmatpush1.msra.mxu0 0.0
  %487 = vmatprep.subr.mxu0 0.0
  %488 = vmatpush1.msra.mxu0 0.0
  %489 = vmatprep.subr.mxu0 0.0
  %490 = vmatpush1.msra.mxu0 0.0
  %491 = vmatprep.subr.mxu0 0.0
  %492 = vmatpush1.msra.mxu0 0.0
  %493 = vmatprep.subr.mxu0 0.0
  %494 = vmatpush1.msra.mxu0 0.0
  %495 = vmatprep.subr.mxu0 0.0
  %496 = vmatpush1.msra.mxu0 0.0
  %497 = vmatprep.subr.mxu0 0.0
  %498 = vmatpush1.msra.mxu0 0.0
  %499 = vmatprep.subr.mxu0 0.0
  %500 = vmatpush1.msra.mxu0 0.0
  %501 = vmatprep.subr.mxu0 0.0
  %502 = vmatpush1.msra.mxu0 0.0
  %503 = vmatprep.subr.mxu0 0.0
  %504 = vmatpush1.msra.mxu0 0.0
  %505 = vmatprep.subr.mxu0 0.0
  %506 = vmatpush1.msra.mxu0 0.0
  %507 = vmatprep.subr.mxu0 0.0
  %508 = vmatpush1.msra.mxu0 0.0
  %509 = vmatprep.subr.mxu0 0.0
  %510 = vmatpush1.msra.mxu0 0.0
  %511 = vmatprep.subr.mxu0 0.0
  %512 = vmatpush1.msra.mxu0 0.0
  %513 = vmatprep.subr.mxu0 0.0
  %514 = vmatpush1.msra.mxu0 0.0
  %515 = vmatprep.subr.mxu0 0.0
  %516 = vmatpush1.msra.mxu0 0.0
  %517 = vmatprep.subr.mxu0 0.0
  %518 = vmatpush1.msra.mxu0 0.0
  %519 = vmatprep.subr.mxu0 0.0
  %520 = vmatpush1.msra.mxu0 0.0
  %521 = vmatprep.subr.mxu0 0.0
  %522 = vmatpush1.msra.mxu0 0.0
  %523 = vmatprep.mubr.f32.mxu0 0.0
  %524 = vmatmul.mubr.f32.gmra.mrb[0].mxu0 %v454
  %v525 = vpop.f32.mrb[0].mxu0
  %v526 = vadd.f32 0.0, %v525
  %v527 = vpop.f32.mrb[0].mxu0
  %528 = vmatprep.mubr.f32.mxu0 0.0
  %529 = vmatmul.mubr.f32.gmra.mrb[0].mxu0 %v457
  %v530 = vpop.f32.mrb[0].mxu0
  %v531 = vadd.f32 0.0, %v530
  %v532 = vpop.f32.mrb[0].mxu0
  %533 = vdwg.mxu0
  %536 = vrot.lane.b32.xlu0 %v38, 32
  %v537 = vpop.permute.xlu0 %536
  %538 = vrot.lane.b32.xlu0 %v39, 32
  %v539 = vpop.permute.xlu0 %538
  %v543 = vsel %vm133, %v526, 0
  %v546 = vsel %vm133, %v531, 0
  %548 = vmatprep.subr.mxu0 0.0
  %549 = vmatpush1.msra.mxu0 %v537
  %550 = vmatprep.subr.mxu0 0.0
  %551 = vmatpush1.msra.mxu0 %v539
  %552 = vmatprep.subr.mxu0 0.0
  %553 = vmatpush1.msra.mxu0 0.0
  %554 = vmatprep.subr.mxu0 0.0
  %555 = vmatpush1.msra.mxu0 0.0
  %556 = vmatprep.subr.mxu0 0.0
  %557 = vmatpush1.msra.mxu0 0.0
  %558 = vmatprep.subr.mxu0 0.0
  %559 = vmatpush1.msra.mxu0 0.0
  %560 = vmatprep.subr.mxu0 0.0
  %561 = vmatpush1.msra.mxu0 0.0
  %562 = vmatprep.subr.mxu0 0.0
  %563 = vmatpush1.msra.mxu0 0.0
  %564 = vmatprep.subr.mxu0 0.0
  %565 = vmatpush1.msra.mxu0 0.0
  %566 = vmatprep.subr.mxu0 0.0
  %567 = vmatpush1.msra.mxu0 0.0
  %568 = vmatprep.subr.mxu0 0.0
  %569 = vmatpush1.msra.mxu0 0.0
  %570 = vmatprep.subr.mxu0 0.0
  %571 = vmatpush1.msra.mxu0 0.0
  %572 = vmatprep.subr.mxu0 0.0
  %573 = vmatpush1.msra.mxu0 0.0
  %574 = vmatprep.subr.mxu0 0.0
  %575 = vmatpush1.msra.mxu0 0.0
  %576 = vmatprep.subr.mxu0 0.0
  %577 = vmatpush1.msra.mxu0 0.0
  %578 = vmatprep.subr.mxu0 0.0
  %579 = vmatpush1.msra.mxu0 0.0
  %580 = vmatprep.subr.mxu0 0.0
  %581 = vmatpush1.msra.mxu0 0.0
  %582 = vmatprep.subr.mxu0 0.0
  %583 = vmatpush1.msra.mxu0 0.0
  %584 = vmatprep.subr.mxu0 0.0
  %585 = vmatpush1.msra.mxu0 0.0
  %586 = vmatprep.subr.mxu0 0.0
  %587 = vmatpush1.msra.mxu0 0.0
  %588 = vmatprep.subr.mxu0 0.0
  %589 = vmatpush1.msra.mxu0 0.0
  %590 = vmatprep.subr.mxu0 0.0
  %591 = vmatpush1.msra.mxu0 0.0
  %592 = vmatprep.subr.mxu0 0.0
  %593 = vmatpush1.msra.mxu0 0.0
  %594 = vmatprep.subr.mxu0 0.0
  %595 = vmatpush1.msra.mxu0 0.0
  %596 = vmatprep.subr.mxu0 0.0
  %597 = vmatpush1.msra.mxu0 0.0
  %598 = vmatprep.subr.mxu0 0.0
  %599 = vmatpush1.msra.mxu0 0.0
  %600 = vmatprep.subr.mxu0 0.0
  %601 = vmatpush1.msra.mxu0 0.0
  %602 = vmatprep.subr.mxu0 0.0
  %603 = vmatpush1.msra.mxu0 0.0
  %604 = vmatprep.subr.mxu0 0.0
  %605 = vmatpush1.msra.mxu0 0.0
  %606 = vmatprep.subr.mxu0 0.0
  %607 = vmatpush1.msra.mxu0 0.0
  %608 = vmatprep.subr.mxu0 0.0
  %609 = vmatpush1.msra.mxu0 0.0
  %610 = vmatprep.subr.mxu0 0.0
  %611 = vmatpush1.msra.mxu0 0.0
  %612 = vmatprep.mubr.f32.mxu0 0.0
  %613 = vmatmul.mubr.f32.gmra.mrb[0].mxu0 %v543
  %v614 = vpop.f32.mrb[0].mxu0
  %v615 = vadd.f32 0.0, %v614
  %v616 = vpop.f32.mrb[0].mxu0
  %617 = vmatprep.mubr.f32.mxu0 0.0
  %618 = vmatmul.mubr.f32.gmra.mrb[0].mxu0 %v546
  %v619 = vpop.f32.mrb[0].mxu0
  %v620 = vadd.f32 0.0, %v619
  %v621 = vpop.f32.mrb[0].mxu0
  %622 = vdwg.mxu0
  %625 = vrot.lane.b32.xlu0 %v36, 32
  %v626 = vpop.permute.xlu0 %625
  %627 = vrot.lane.b32.xlu0 %v37, 32
  %v628 = vpop.permute.xlu0 %627
  %v632 = vsel %vm133, %v322, 0
  %v635 = vsel %vm133, %v327, 0
  %637 = vmatprep.subr.mxu0 0.0
  %638 = vmatpush1.msra.mxu0 %v626
  %639 = vmatprep.subr.mxu0 0.0
  %640 = vmatpush1.msra.mxu0 %v628
  %641 = vmatprep.subr.mxu0 0.0
  %642 = vmatpush1.msra.mxu0 0.0
  %643 = vmatprep.subr.mxu0 0.0
  %644 = vmatpush1.msra.mxu0 0.0
  %645 = vmatprep.subr.mxu0 0.0
  %646 = vmatpush1.msra.mxu0 0.0
  %647 = vmatprep.subr.mxu0 0.0
  %648 = vmatpush1.msra.mxu0 0.0
  %649 = vmatprep.subr.mxu0 0.0
  %650 = vmatpush1.msra.mxu0 0.0
  %651 = vmatprep.subr.mxu0 0.0
  %652 = vmatpush1.msra.mxu0 0.0
  %653 = vmatprep.subr.mxu0 0.0
  %654 = vmatpush1.msra.mxu0 0.0
  %655 = vmatprep.subr.mxu0 0.0
  %656 = vmatpush1.msra.mxu0 0.0
  %657 = vmatprep.subr.mxu0 0.0
  %658 = vmatpush1.msra.mxu0 0.0
  %659 = vmatprep.subr.mxu0 0.0
  %660 = vmatpush1.msra.mxu0 0.0
  %661 = vmatprep.subr.mxu0 0.0
  %662 = vmatpush1.msra.mxu0 0.0
  %663 = vmatprep.subr.mxu0 0.0
  %664 = vmatpush1.msra.mxu0 0.0
  %665 = vmatprep.subr.mxu0 0.0
  %666 = vmatpush1.msra.mxu0 0.0
  %667 = vmatprep.subr.mxu0 0.0
  %668 = vmatpush1.msra.mxu0 0.0
  %669 = vmatprep.subr.mxu0 0.0
  %670 = vmatpush1.msra.mxu0 0.0
  %671 = vmatprep.subr.mxu0 0.0
  %672 = vmatpush1.msra.mxu0 0.0
  %673 = vmatprep.subr.mxu0 0.0
  %674 = vmatpush1.msra.mxu0 0.0
  %675 = vmatprep.subr.mxu0 0.0
  %676 = vmatpush1.msra.mxu0 0.0
  %677 = vmatprep.subr.mxu0 0.0
  %678 = vmatpush1.msra.mxu0 0.0
  %679 = vmatprep.subr.mxu0 0.0
  %680 = vmatpush1.msra.mxu0 0.0
  %681 = vmatprep.subr.mxu0 0.0
  %682 = vmatpush1.msra.mxu0 0.0
  %683 = vmatprep.subr.mxu0 0.0
  %684 = vmatpush1.msra.mxu0 0.0
  %685 = vmatprep.subr.mxu0 0.0
  %686 = vmatpush1.msra.mxu0 0.0
  %687 = vmatprep.subr.mxu0 0.0
  %688 = vmatpush1.msra.mxu0 0.0
  %689 = vmatprep.subr.mxu0 0.0
  %690 = vmatpush1.msra.mxu0 0.0
  %691 = vmatprep.subr.mxu0 0.0
  %692 = vmatpush1.msra.mxu0 0.0
  %693 = vmatprep.subr.mxu0 0.0
  %694 = vmatpush1.msra.mxu0 0.0
  %695 = vmatprep.subr.mxu0 0.0
  %696 = vmatpush1.msra.mxu0 0.0
  %697 = vmatprep.subr.mxu0 0.0
  %698 = vmatpush1.msra.mxu0 0.0
  %699 = vmatprep.subr.mxu0 0.0
  %700 = vmatpush1.msra.mxu0 0.0
  %701 = vmatprep.mubr.f32.mxu0 0.0
  %702 = vmatmul.mubr.f32.gmra.mrb[0].mxu0 %v632
  %v703 = vpop.f32.mrb[0].mxu0
  %v704 = vadd.f32 %v615, %v703
  %v705 = vpop.f32.mrb[0].mxu0
  %706 = vmatprep.mubr.f32.mxu0 0.0
  %707 = vmatmul.mubr.f32.gmra.mrb[0].mxu0 %v635
  %v708 = vpop.f32.mrb[0].mxu0
  %v709 = vadd.f32 %v620, %v708
  %v710 = vpop.f32.mrb[0].mxu0
  %711 = vdwg.mxu0
  %713 = vrot.lane.b32.xlu0 %v44, 32
  %v714 = vpop.permute.xlu0 %713
  %v716 = vadd.f32 %v704, %v714
  %v717 = vadd.f32 %v709, %v714
  %v718 = vadd.f32 %v32, %v716
  %v719 = vadd.f32 %v33, %v717
  %v720 = vsel %vm45, %v718, 0.0
  %721 = vadd.xlane.f32.xlu0 %v720
  %v722 = vpop.xlane.xlu0 %721
  %v723 = vsel %vm45, %v719, 0.0
  %724 = vadd.xlane.f32.xlu0 %v723
  %v725 = vpop.xlane.xlu0 %724
  %v726 = vrcp.pop 32.0
  %v727 = vmul.f32 %v722, %v726
  %v728 = vmul.f32 %v725, %v726
  %v729 = vsub.f32 %v718, %v727
  %v730 = vsub.f32 %v719, %v728
  %v731 = vmul.f32 %v729, %v729
  %v732 = vmul.f32 %v730, %v730
  %v733 = vsel %vm45, %v731, 0.0
  %734 = vadd.xlane.f32.xlu0 %v733
  %v735 = vpop.xlane.xlu0 %734
  %v736 = vsel %vm45, %v732, 0.0
  %737 = vadd.xlane.f32.xlu0 %v736
  %v738 = vpop.xlane.xlu0 %737
  %v739 = vmul.f32 %v735, %v726
  %v740 = vmul.f32 %v738, %v726
  %v741 = vadd.f32 %v739, 1e-12
  %v742 = vadd.f32 %v740, 1e-12
  %v743 = vrsqrt.pop %v741
  %v744 = vrsqrt.pop %v742
  %v745 = vmul.f32 %v729, %v743
  %v746 = vmul.f32 %v730, %v744
  %v747 = vlaneseq
  %v748 = vshrl.u32 %v747, 7
  %v749 = vsub.s32 2, %v748
  %v750 = vrot.slane %v40, %v749
  %v751 = vmul.f32 %v745, %v750
  %v752 = vmul.f32 %v746, %v750
  %754 = vrot.lane.b32.xlu0 %v750, 96
  %v755 = vpop.permute.xlu0 %754
  %v757 = vadd.f32 %v751, %v755
  %v758 = vadd.f32 %v752, %v755
  %v759 = vld [vmem:[%s5] sm:$0xff]
  %v760 = vld [vmem:[%s5 + $0x8] sm:$0xff]
  %v761 = vld [vmem:[%s5 + $0x10] sm:$0xff]
  %v762 = vld [vmem:[%s5 + $0x18] sm:$0xff]
  %v763 = vlaneseq
  %v764 = vshrl.u32 %v763, 7
  %v765 = vsub.s32 1, %v764
  %v766 = vrot.slane %v40, %v765
  %v768 = vsel %vm45, %v757, 0
  %v771 = vsel %vm45, %v758, 0
  %773 = vmatprep.subr.mxu0 0.0
  %774 = vmatpush1.msra.mxu0 %v759
  %775 = vmatprep.subr.mxu0 0.0
  %776 = vmatpush1.msra.mxu0 %v760
  %777 = vmatprep.subr.mxu0 0.0
  %778 = vmatpush1.msra.mxu0 %v761
  %779 = vmatprep.subr.mxu0 0.0
  %780 = vmatpush1.msra.mxu0 %v762
  %781 = vmatprep.subr.mxu0 0.0
  %782 = vmatpush1.msra.mxu0 0.0
  %783 = vmatprep.subr.mxu0 0.0
  %784 = vmatpush1.msra.mxu0 0.0
  %785 = vmatprep.subr.mxu0 0.0
  %786 = vmatpush1.msra.mxu0 0.0
  %787 = vmatprep.subr.mxu0 0.0
  %788 = vmatpush1.msra.mxu0 0.0
  %789 = vmatprep.subr.mxu0 0.0
  %790 = vmatpush1.msra.mxu0 0.0
  %791 = vmatprep.subr.mxu0 0.0
  %792 = vmatpush1.msra.mxu0 0.0
  %793 = vmatprep.subr.mxu0 0.0
  %794 = vmatpush1.msra.mxu0 0.0
  %795 = vmatprep.subr.mxu0 0.0
  %796 = vmatpush1.msra.mxu0 0.0
  %797 = vmatprep.subr.mxu0 0.0
  %798 = vmatpush1.msra.mxu0 0.0
  %799 = vmatprep.subr.mxu0 0.0
  %800 = vmatpush1.msra.mxu0 0.0
  %801 = vmatprep.subr.mxu0 0.0
  %802 = vmatpush1.msra.mxu0 0.0
  %803 = vmatprep.subr.mxu0 0.0
  %804 = vmatpush1.msra.mxu0 0.0
  %805 = vmatprep.subr.mxu0 0.0
  %806 = vmatpush1.msra.mxu0 0.0
  %807 = vmatprep.subr.mxu0 0.0
  %808 = vmatpush1.msra.mxu0 0.0
  %809 = vmatprep.subr.mxu0 0.0
  %810 = vmatpush1.msra.mxu0 0.0
  %811 = vmatprep.subr.mxu0 0.0
  %812 = vmatpush1.msra.mxu0 0.0
  %813 = vmatprep.subr.mxu0 0.0
  %814 = vmatpush1.msra.mxu0 0.0
  %815 = vmatprep.subr.mxu0 0.0
  %816 = vmatpush1.msra.mxu0 0.0
  %817 = vmatprep.subr.mxu0 0.0
  %818 = vmatpush1.msra.mxu0 0.0
  %819 = vmatprep.subr.mxu0 0.0
  %820 = vmatpush1.msra.mxu0 0.0
  %821 = vmatprep.subr.mxu0 0.0
  %822 = vmatpush1.msra.mxu0 0.0
  %823 = vmatprep.subr.mxu0 0.0
  %824 = vmatpush1.msra.mxu0 0.0
  %825 = vmatprep.subr.mxu0 0.0
  %826 = vmatpush1.msra.mxu0 0.0
  %827 = vmatprep.subr.mxu0 0.0
  %828 = vmatpush1.msra.mxu0 0.0
  %829 = vmatprep.subr.mxu0 0.0
  %830 = vmatpush1.msra.mxu0 0.0
  %831 = vmatprep.subr.mxu0 0.0
  %832 = vmatpush1.msra.mxu0 0.0
  %833 = vmatprep.subr.mxu0 0.0
  %834 = vmatpush1.msra.mxu0 0.0
  %835 = vmatprep.subr.mxu0 0.0
  %836 = vmatpush1.msra.mxu0 0.0
  %837 = vmatprep.mubr.f32.mxu0 0.0
  %838 = vmatmul.mubr.f32.gmra.mrb[0].mxu0 %v768
  %v839 = vpop.f32.mrb[0].mxu0
  %v840 = vadd.f32 %v766, %v839
  %v841 = vpop.f32.mrb[0].mxu0
  %842 = vmatprep.mubr.f32.mxu0 0.0
  %843 = vmatmul.mubr.f32.gmra.mrb[0].mxu0 %v771
  %v844 = vpop.f32.mrb[0].mxu0
  %v845 = vadd.f32 %v766, %v844
  %v846 = vpop.f32.mrb[0].mxu0
  %847 = vdwg.mxu0
  %v848 = vmul.f32 %v840, 0.5
  %v849 = vmul.f32 %v845, 0.5
  %v850 = vmul.f32 %v840, 0.044715
  %v851 = vmul.f32 %v845, 0.044715
  %v852 = vmul.f32 %v850, %v840
  %v853 = vmul.f32 %v851, %v845
  %v854 = vmul.f32 %v852, %v840
  %v855 = vmul.f32 %v853, %v845
  %v856 = vadd.f32 %v840, %v854
  %v857 = vadd.f32 %v845, %v855
  %v858 = vmul.f32 %v856, 0.7978846
  %v859 = vmul.f32 %v857, 0.7978846
  %v860 = vtanh.pop %v858
  %v861 = vtanh.pop %v859
  %v862 = vadd.f32 %v860, 1.0
  %v863 = vadd.f32 %v861, 1.0
  %v864 = vmul.f32 %v848, %v862
  %v865 = vmul.f32 %v849, %v863
  %v866 = vld [vmem:[%s6] sm:$0xff]
  %v867 = vld [vmem:[%s6 + $0x8] sm:$0xff]
  %v868 = vld [vmem:[%s6 + $0x10] sm:$0xff]
  %v869 = vld [vmem:[%s6 + $0x18] sm:$0xff]
  %v870 = vld [vmem:[%s6 + $0x20] sm:$0xff]
  %v871 = vld [vmem:[%s6 + $0x28] sm:$0xff]
  %v872 = vld [vmem:[%s6 + $0x30] sm:$0xff]
  %v873 = vld [vmem:[%s6 + $0x38] sm:$0xff]
  %v874 = vld [vmem:[%s6 + $0x40] sm:$0xff]
  %v875 = vld [vmem:[%s6 + $0x48] sm:$0xff]
  %v876 = vld [vmem:[%s6 + $0x50] sm:$0xff]
  %v877 = vld [vmem:[%s6 + $0x58] sm:$0xff]
  %v878 = vld [vmem:[%s6 + $0x60] sm:$0xff]
  %v879 = vld [vmem:[%s6 + $0x68] sm:$0xff]
  %v880 = vld [vmem:[%s6 + $0x70] sm:$0xff]
  %v881 = vld [vmem:[%s6 + $0x78] sm:$0xff]
  %v882 = vlaneseq
  %v883 = vshrl.u32 %v882, 7
  %v884 = vsub.s32 3, %v883
  %v885 = vrot.slane %v40, %v884
  %886 = vmatprep.subr.mxu0 0.0
  %887 = vmatpush1.msra.mxu0 %v866
  %888 = vmatprep.subr.mxu0 0.0
  %889 = vmatpush1.msra.mxu0 %v867
  %890 = vmatprep.subr.mxu0 0.0
  %891 = vmatpush1.msra.mxu0 %v868
  %892 = vmatprep.subr.mxu0 0.0
  %893 = vmatpush1.msra.mxu0 %v869
  %894 = vmatprep.subr.mxu0 0.0
  %895 = vmatpush1.msra.mxu0 %v870
  %896 = vmatprep.subr.mxu0 0.0
  %897 = vmatpush1.msra.mxu0 %v871
  %898 = vmatprep.subr.mxu0 0.0
  %899 = vmatpush1.msra.mxu0 %v872
  %900 = vmatprep.subr.mxu0 0.0
  %901 = vmatpush1.msra.mxu0 %v873
  %902 = vmatprep.subr.mxu0 0.0
  %903 = vmatpush1.msra.mxu0 %v874
  %904 = vmatprep.subr.mxu0 0.0
  %905 = vmatpush1.msra.mxu0 %v875
  %906 = vmatprep.subr.mxu0 0.0
  %907 = vmatpush1.msra.mxu0 %v876
  %908 = vmatprep.subr.mxu0 0.0
  %909 = vmatpush1.msra.mxu0 %v877
  %910 = vmatprep.subr.mxu0 0.0
  %911 = vmatpush1.msra.mxu0 %v878
  %912 = vmatprep.subr.mxu0 0.0
  %913 = vmatpush1.msra.mxu0 %v879
  %914 = vmatprep.subr.mxu0 0.0
  %915 = vmatpush1.msra.mxu0 %v880
  %916 = vmatprep.subr.mxu0 0.0
  %917 = vmatpush1.msra.mxu0 %v881
  %918 = vmatprep.subr.mxu0 0.0
  %919 = vmatpush1.msra.mxu0 0.0
  %920 = vmatprep.subr.mxu0 0.0
  %921 = vmatpush1.msra.mxu0 0.0
  %922 = vmatprep.subr.mxu0 0.0
  %923 = vmatpush1.msra.mxu0 0.0
  %924 = vmatprep.subr.mxu0 0.0
  %925 = vmatpush1.msra.mxu0 0.0
  %926 = vmatprep.subr.mxu0 0.0
  %927 = vmatpush1.msra.mxu0 0.0
  %928 = vmatprep.subr.mxu0 0.0
  %929 = vmatpush1.msra.mxu0 0.0
  %930 = vmatprep.subr.mxu0 0.0
  %931 = vmatpush1.msra.mxu0 0.0
  %932 = vmatprep.subr.mxu0 0.0
  %933 = vmatpush1.msra.mxu0 0.0
  %934 = vmatprep.subr.mxu0 0.0
  %935 = vmatpush1.msra.mxu0 0.0
  %936 = vmatprep.subr.mxu0 0.0
  %937 = vmatpush1.msra.mxu0 0.0
  %938 = vmatprep.subr.mxu0 0.0
  %939 = vmatpush1.msra.mxu0 0.0
  %940 = vmatprep.subr.mxu0 0.0
  %941 = vmatpush1.msra.mxu0 0.0
  %942 = vmatprep.subr.mxu0 0.0
  %943 = vmatpush1.msra.mxu0 0.0
  %944 = vmatprep.subr.mxu0 0.0
  %945 = vmatpush1.msra.mxu0 0.0
  %946 = vmatprep.subr.mxu0 0.0
  %947 = vmatpush1.msra.mxu0 0.0
  %948 = vmatprep.subr.mxu0 0.0
  %949 = vmatpush1.msra.mxu0 0.0
  %950 = vmatprep.mubr.f32.mxu0 0.0
  %951 = vmatmul.mubr.f32.gmra.mrb[0].mxu0 %v864
  %v952 = vpop.f32.mrb[0].mxu0
  %v953 = vadd.f32 %v885, %v952
  %v954 = vpop.f32.mrb[0].mxu0
  %955 = vmatprep.mubr.f32.mxu0 0.0
  %956 = vmatmul.mubr.f32.gmra.mrb[0].mxu0 %v865
  %v957 = vpop.f32.mrb[0].mxu0
  %v958 = vadd.f32 %v885, %v957
  %v959 = vpop.f32.mrb[0].mxu0
  %960 = vdwg.mxu0
  %v961 = vadd.f32 %v757, %v953
  %v962 = vadd.f32 %v758, %v958
  %v963 = vsel %vm45, %v961, 0.0
  %964 = vadd.xlane.f32.xlu0 %v963
  %v965 = vpop.xlane.xlu0 %964
  %v966 = vsel %vm45, %v962, 0.0
  %967 = vadd.xlane.f32.xlu0 %v966
  %v968 = vpop.xlane.xlu0 %967
  %v969 = vmul.f32 %v965, %v726
  %v970 = vmul.f32 %v968, %v726
  %v971 = vsub.f32 %v961, %v969
  %v972 = vsub.f32 %v962, %v970
  %v973 = vmul.f32 %v971, %v971
  %v974 = vmul.f32 %v972, %v972
  %v975 = vsel %vm45, %v973, 0.0
  %976 = vadd.xlane.f32.xlu0 %v975
  %v977 = vpop.xlane.xlu0 %976
  %v978 = vsel %vm45, %v974, 0.0
  %979 = vadd.xlane.f32.xlu0 %v978
  %v980 = vpop.xlane.xlu0 %979
  %v981 = vmul.f32 %v977, %v726
  %v982 = vmul.f32 %v980, %v726
  %v983 = vadd.f32 %v981, 1e-12
  %v984 = vadd.f32 %v982, 1e-12
  %v985 = vrsqrt.pop %v983
  %v986 = vrsqrt.pop %v984
  %v987 = vmul.f32 %v971, %v985
  %v988 = vmul.f32 %v972, %v986
  %989 = vrot.lane.b32.xlu0 %v750, 64
  %v990 = vpop.permute.xlu0 %989
  %v992 = vmul.f32 %v987, %v990
  %v993 = vmul.f32 %v988, %v990
  %994 = vrot.lane.b32.xlu0 %v750, 32
  %v995 = vpop.permute.xlu0 %994
  %v997 = vadd.f32 %v992, %v995
  %v998 = vadd.f32 %v993, %v995
  %s999 = scalar_lea.vmem %s3, 32
  %v1000 = vld [vmem:[%s999] sm:$0xff]
  %v1001 = vld [vmem:[%s999 + $0x8] sm:$0xff]
  %v1002 = vld [vmem:[%s999 + $0x10] sm:$0xff]
  %v1003 = vld [vmem:[%s999 + $0x18] sm:$0xff]
  %s1004 = scalar_lea.vmem %s4, 4
  %v1005 = vld [vmem:[%s1004] sm:$0xf]
  %v1006 = vlaneseq
  %v1007 = vshrl.u32 %v1006, 7
  %v1008 = vsub.s32 0, %v1007
  %v1009 = vrot.slane %v1005, %v1008
  %v1011 = vsel %vm45, %v997, 0
  %v1014 = vsel %vm45, %v998, 0
  %1016 = vmatprep.subr.mxu0 0.0
  %1017 = vmatpush1.msra.mxu0 %v1000
  %1018 = vmatprep.subr.mxu0 0.0
  %1019 = vmatpush1.msra.mxu0 %v1001
  %1020 = vmatprep.subr.mxu0 0.0
  %1021 = vmatpush1.msra.mxu0 %v1002
  %1022 = vmatprep.subr.mxu0 0.0
  %1023 = vmatpush1.msra.mxu0 %v1003
  %1024 = vmatprep.subr.mxu0 0.0
  %1025 = vmatpush1.msra.mxu0 0.0
  %1026 = vmatprep.subr.mxu0 0.0
  %1027 = vmatpush1.msra.mxu0 0.0
  %1028 = vmatprep.subr.mxu0 0.0
  %1029 = vmatpush1.msra.mxu0 0.0
  %1030 = vmatprep.subr.mxu0 0.0
  %1031 = vmatpush1.msra.mxu0 0.0
  %1032 = vmatprep.subr.mxu0 0.0
  %1033 = vmatpush1.msra.mxu0 0.0
  %1034 = vmatprep.subr.mxu0 0.0
  %1035 = vmatpush1.msra.mxu0 0.0
  %1036 = vmatprep.subr.mxu0 0.0
  %1037 = vmatpush1.msra.mxu0 0.0
  %1038 = vmatprep.subr.mxu0 0.0
  %1039 = vmatpush1.msra.mxu0 0.0
  %1040 = vmatprep.subr.mxu0 0.0
  %1041 = vmatpush1.msra.mxu0 0.0
  %1042 = vmatprep.subr.mxu0 0.0
  %1043 = vmatpush1.msra.mxu0 0.0
  %1044 = vmatprep.subr.mxu0 0.0
  %1045 = vmatpush1.msra.mxu0 0.0
  %1046 = vmatprep.subr.mxu0 0.0
  %1047 = vmatpush1.msra.mxu0 0.0
  %1048 = vmatprep.subr.mxu0 0.0
  %1049 = vmatpush1.msra.mxu0 0.0
  %1050 = vmatprep.subr.mxu0 0.0
  %1051 = vmatpush1.msra.mxu0 0.0
  %1052 = vmatprep.subr.mxu0 0.0
  %1053 = vmatpush1.msra.mxu0 0.0
  %1054 = vmatprep.subr.mxu0 0.0
  %1055 = vmatpush1.msra.mxu0 0.0
  %1056 = vmatprep.subr.mxu0 0.0
  %1057 = vmatpush1.msra.mxu0 0.0
  %1058 = vmatprep.subr.mxu0 0.0
  %1059 = vmatpush1.msra.mxu0 0.0
  %1060 = vmatprep.subr.mxu0 0.0
  %1061 = vmatpush1.msra.mxu0 0.0
  %1062 = vmatprep.subr.mxu0 0.0
  %1063 = vmatpush1.msra.mxu0 0.0
  %1064 = vmatprep.subr.mxu0 0.0
  %1065 = vmatpush1.msra.mxu0 0.0
  %1066 = vmatprep.subr.mxu0 0.0
  %1067 = vmatpush1.msra.mxu0 0.0
  %1068 = vmatprep.subr.mxu0 0.0
  %1069 = vmatpush1.msra.mxu0 0.0
  %1070 = vmatprep.subr.mxu0 0.0
  %1071 = vmatpush1.msra.mxu0 0.0
  %1072 = vmatprep.subr.mxu0 0.0
  %1073 = vmatpush1.msra.mxu0 0.0
  %1074 = vmatprep.subr.mxu0 0.0
  %1075 = vmatpush1.msra.mxu0 0.0
  %1076 = vmatprep.subr.mxu0 0.0
  %1077 = vmatpush1.msra.mxu0 0.0
  %1078 = vmatprep.subr.mxu0 0.0
  %1079 = vmatpush1.msra.mxu0 0.0
  %1080 = vmatprep.mubr.f32.mxu0 0.0
  %1081 = vmatmul.mubr.f32.gmra.mrb[0].mxu0 %v1011
  %v1082 = vpop.f32.mrb[0].mxu0
  %v1083 = vadd.f32 %v1009, %v1082
  %v1084 = vpop.f32.mrb[0].mxu0
  %1085 = vmatprep.mubr.f32.mxu0 0.0
  %1086 = vmatmul.mubr.f32.gmra.mrb[0].mxu0 %v1014
  %v1087 = vpop.f32.mrb[0].mxu0
  %v1088 = vadd.f32 %v1009, %v1087
  %v1089 = vpop.f32.mrb[0].mxu0
  %1090 = vdwg.mxu0
  %1093 = vrot.lane.b32.xlu0 %v1083, 96
  %v1094 = vpop.permute.xlu0 %1093
  %1095 = vrot.lane.b32.xlu0 %v1088, 96
  %v1096 = vpop.permute.xlu0 %1095
  %v1097 = vsel %vm133, %v1083, 0
  %v1099 = vsel %vm133, %v1088, 0
  %v1101 = vsel %vm133, %v1094, 0
  %v1103 = vsel %vm133, %v1096, 0
  %1105 = vmatprep.subr.mxu0 0.0
  %1106 = vmatpush1.xpose.msra.mxu0 %v1101
  %1107 = vmatprep.subr.mxu0 0.0
  %1108 = vmatpush1.xpose.msra.mxu0 %v1103
  %1109 = vmatprep.subr.mxu0 0.0
  %1110 = vmatpush1.xpose.msra.mxu0 0.0
  %1111 = vmatprep.subr.mxu0 0.0
  %1112 = vmatpush1.xpose.msra.mxu0 0.0
  %1113 = vmatprep.subr.mxu0 0.0
  %1114 = vmatpush1.xpose.msra.mxu0 0.0
  %1115 = vmatprep.subr.mxu0 0.0
  %1116 = vmatpush1.xpose.msra.mxu0 0.0
  %1117 = vmatprep.subr.mxu0 0.0
  %1118 = vmatpush1.xpose.msra.mxu0 0.0
  %1119 = vmatprep.subr.mxu0 0.0
  %1120 = vmatpush1.xpose.msra.mxu0 0.0
  %1121 = vmatprep.subr.mxu0 0.0
  %1122 = vmatpush1.xpose.msra.mxu0 0.0
  %1123 = vmatprep.subr.mxu0 0.0
  %1124 = vmatpush1.xpose.msra.mxu0 0.0
  %1125 = vmatprep.subr.mxu0 0.0
  %1126 = vmatpush1.xpose.msra.mxu0 0.0
  %1127 = vmatprep.subr.mxu0 0.0
  %1128 = vmatpush1.xpose.msra.mxu0 0.0
  %1129 = vmatprep.subr.mxu0 0.0
  %1130 = vmatpush1.xpose.msra.mxu0 0.0
  %1131 = vmatprep.subr.mxu0 0.0
  %1132 = vmatpush1.xpose.msra.mxu0 0.0
  %1133 = vmatprep.subr.mxu0 0.0
  %1134 = vmatpush1.xpose.msra.mxu0 0.0
  %1135 = vmatprep.subr.mxu0 0.0
  %1136 = vmatpush1.xpose.msra.mxu0 0.0
  %1137 = vmatprep.subr.mxu0 0.0
  %1138 = vmatpush1.xpose.msra.mxu0 0.0
  %1139 = vmatprep.subr.mxu0 0.0
  %1140 = vmatpush1.xpose.msra.mxu0 0.0
  %1141 = vmatprep.subr.mxu0 0.0
  %1142 = vmatpush1.xpose.msra.mxu0 0.0
  %1143 = vmatprep.subr.mxu0 0.0
  %1144 = vmatpush1.xpose.msra.mxu0 0.0
  %1145 = vmatprep.subr.mxu0 0.0
  %1146 = vmatpush1.xpose.msra.mxu0 0.0
  %1147 = vmatprep.subr.mxu0 0.0
  %1148 = vmatpush1.xpose.msra.mxu0 0.0
  %1149 = vmatprep.subr.mxu0 0.0
  %1150 = vmatpush1.xpose.msra.mxu0 0.0
  %1151 = vmatprep.subr.mxu0 0.0
  %1152 = vmatpush1.xpose.msra.mxu0 0.0
  %1153 = vmatprep.subr.mxu0 0.0
  %1154 = vmatpush1.xpose.msra.mxu0 0.0
  %1155 = vmatprep.subr.mxu0 0.0
  %1156 = vmatpush1.xpose.msra.mxu0 0.0
  %1157 = vmatprep.subr.mxu0 0.0
  %1158 = vmatpush1.xpose.msra.mxu0 0.0
  %1159 = vmatprep.subr.mxu0 0.0
  %1160 = vmatpush1.xpose.msra.mxu0 0.0
  %1161 = vmatprep.subr.mxu0 0.0
  %1162 = vmatpush1.xpose.msra.mxu0 0.0
  %1163 = vmatprep.subr.mxu0 0.0
  %1164 = vmatpush1.xpose.msra.mxu0 0.0
  %1165 = vmatprep.subr.mxu0 0.0
  %1166 = vmatpush1.xpose.msra.mxu0 0.0
  %1167 = vmatprep.subr.mxu0 0.0
  %1168 = vmatpush1.xpose.msra.mxu0 0.0
  %1169 = vmatprep.mubr.f32.mxu0 0.0
  %1170 = vmatmul.mubr.f32.gmra.mrb[0].mxu0 %v1097
  %v1171 = vpop.f32.mrb[0].mxu0
  %v1172 = vadd.f32 0.0, %v1171
  %v1173 = vpop.f32.mrb[0].mxu0
  %1174 = vmatprep.mubr.f32.mxu0 0.0
  %1175 = vmatmul.mubr.f32.gmra.mrb[0].mxu0 %v1099
  %v1176 = vpop.f32.mrb[0].mxu0
  %v1177 = vadd.f32 0.0, %v1176
  %v1178 = vpop.f32.mrb[0].mxu0
  %1179 = vdwg.mxu0
  %v1180 = vmul.f32 %v1172, 0.25
  %v1181 = vmul.f32 %v1177, 0.25
  %v1182 = vadd.f32 %v1180, %v34
  %v1183 = vadd.f32 %v1181, %v35
  %v1184 = vsel %vm133, %v1182, -inf
  %1185 = vmax.xlane.f32.xlu0 %v1184
  %v1186 = vpop.xlane.xlu0 %1185
  %v1187 = vsel %vm133, %v1183, -inf
  %1188 = vmax.xlane.f32.xlu0 %v1187
  %v1189 = vpop.xlane.xlu0 %1188
  %v1190 = vsub.f32 %v1182, %v1186
  %v1191 = vsub.f32 %v1183, %v1189
  %v1192 = vmul.f32 %v1190, 1.442695
  %v1193 = vpow.pop %v1192
  %v1194 = vmul.f32 %v1191, 1.442695
  %v1195 = vpow.pop %v1194
  %v1196 = vsel %vm133, %v1193, 0.0
  %1197 = vadd.xlane.f32.xlu0 %v1196
  %v1198 = vpop.xlane.xlu0 %1197
  %v1199 = vsel %vm133, %v1195, 0.0
  %1200 = vadd.xlane.f32.xlu0 %v1199
  %v1201 = vpop.xlane.xlu0 %1200
  %v1202 = vrcp.pop %v1198
  %v1203 = vrcp.pop %v1201
  %v1204 = vmul.f32 %v1193, %v1202
  %v1205 = vmul.f32 %v1195, %v1203
  %1206 = vrot.lane.b32.xlu0 %v1083, 64
  %v1207 = vpop.permute.xlu0 %1206
  %1208 = vrot.lane.b32.xlu0 %v1088, 64
  %v1209 = vpop.permute.xlu0 %1208
  %v1213 = vsel %vm133, %v1204, 0
  %v1216 = vsel %vm133, %v1205, 0
  %1218 = vmatprep.subr.mxu0 0.0
  %1219 = vmatpush1.msra.mxu0 %v1207
  %1220 = vmatprep.subr.mxu0 0.0
  %1221 = vmatpush1.msra.mxu0 %v1209
  %1222 = vmatprep.subr.mxu0 0.0
  %1223 = vmatpush1.msra.mxu0 0.0
  %1224 = vmatprep.subr.mxu0 0.0
  %1225 = vmatpush1.msra.mxu0 0.0
  %1226 = vmatprep.subr.mxu0 0.0
  %1227 = vmatpush1.msra.mxu0 0.0
  %1228 = vmatprep.subr.mxu0 0.0
  %1229 = vmatpush1.msra.mxu0 0.0
  %1230 = vmatprep.subr.mxu0 0.0
  %1231 = vmatpush1.msra.mxu0 0.0
  %1232 = vmatprep.subr.mxu0 0.0
  %1233 = vmatpush1.msra.mxu0 0.0
  %1234 = vmatprep.subr.mxu0 0.0
  %1235 = vmatpush1.msra.mxu0 0.0
  %1236 = vmatprep.subr.mxu0 0.0
  %1237 = vmatpush1.msra.mxu0 0.0
  %1238 = vmatprep.subr.mxu0 0.0
  %1239 = vmatpush1.msra.mxu0 0.0
  %1240 = vmatprep.subr.mxu0 0.0
  %1241 = vmatpush1.msra.mxu0 0.0
  %1242 = vmatprep.subr.mxu0 0.0
  %1243 = vmatpush1.msra.mxu0 0.0
  %1244 = vmatprep.subr.mxu0 0.0
  %1245 = vmatpush1.msra.mxu0 0.0
  %1246 = vmatprep.subr.mxu0 0.0
  %1247 = vmatpush1.msra.mxu0 0.0
  %1248 = vmatprep.subr.mxu0 0.0
  %1249 = vmatpush1.msra.mxu0 0.0
  %1250 = vmatprep.subr.mxu0 0.0
  %1251 = vmatpush1.msra.mxu0 0.0
  %1252 = vmatprep.subr.mxu0 0.0
  %1253 = vmatpush1.msra.mxu0 0.0
  %1254 = vmatprep.subr.mxu0 0.0
  %1255 = vmatpush1.msra.mxu0 0.0
  %1256 = vmatprep.subr.mxu0 0.0
  %1257 = vmatpush1.msra.mxu0 0.0
  %1258 = vmatprep.subr.mxu0 0.0
  %1259 = vmatpush1.msra.mxu0 0.0
  %1260 = vmatprep.subr.mxu0 0.0
  %1261 = vmatpush1.msra.mxu0 0.0
  %1262 = vmatprep.subr.mxu0 0.0
  %1263 = vmatpush1.msra.mxu0 0.0
  %1264 = vmatprep.subr.mxu0 0.0
  %1265 = vmatpush1.msra.mxu0 0.0
  %1266 = vmatprep.subr.mxu0 0.0
  %1267 = vmatpush1.msra.mxu0 0.0
  %1268 = vmatprep.subr.mxu0 0.0
  %1269 = vmatpush1.msra.mxu0 0.0
  %1270 = vmatprep.subr.mxu0 0.0
  %1271 = vmatpush1.msra.mxu0 0.0
  %1272 = vmatprep.subr.mxu0 0.0
  %1273 = vmatpush1.msra.mxu0 0.0
  %1274 = vmatprep.subr.mxu0 0.0
  %1275 = vmatpush1.msra.mxu0 0.0
  %1276 = vmatprep.subr.mxu0 0.0
  %1277 = vmatpush1.msra.mxu0 0.0
  %1278 = vmatprep.subr.mxu0 0.0
  %1279 = vmatpush1.msra.mxu0 0.0
  %1280 = vmatprep.subr.mxu0 0.0
  %1281 = vmatpush1.msra.mxu0 0.0
  %1282 = vmatprep.mubr.f32.mxu0 0.0
  %1283 = vmatmul.mubr.f32.gmra.mrb[0].mxu0 %v1213
  %v1284 = vpop.f32.mrb[0].mxu0
  %v1285 = vadd.f32 0.0, %v1284
  %v1286 = vpop.f32.mrb[0].mxu0
  %1287 = vmatprep.mubr.f32.mxu0 0.0
  %1288 = vmatmul.mubr.f32.gmra.mrb[0].mxu0 %v1216
  %v1289 = vpop.f32.mrb[0].mxu0
  %v1290 = vadd.f32 0.0, %v1289
  %v1291 = vpop.f32.mrb[0].mxu0
  %1292 = vdwg.mxu0
  %1293 = vrot.lane.b32.xlu0 %v1083, 112
  %v1294 = vpop.permute.xlu0 %1293
  %1295 = vrot.lane.b32.xlu0 %v1088, 112
  %v1296 = vpop.permute.xlu0 %1295
  %1297 = vrot.lane.b32.xlu0 %v1083, 80
  %v1298 = vpop.permute.xlu0 %1297
  %1299 = vrot.lane.b32.xlu0 %v1088, 80
  %v1300 = vpop.permute.xlu0 %1299
  %v1301 = vsel %vm133, %v1294, 0
  %v1303 = vsel %vm133, %v1296, 0
  %v1305 = vsel %vm133, %v1298, 0
  %v1307 = vsel %vm133, %v1300, 0
  %1309 = vmatprep.subr.mxu0 0.0
  %1310 = vmatpush1.xpose.msra.mxu0 %v1305
  %1311 = vmatprep.subr.mxu0 0.0
  %1312 = vmatpush1.xpose.msra.mxu0 %v1307
  %1313 = vmatprep.subr.mxu0 0.0
  %1314 = vmatpush1.xpose.msra.mxu0 0.0
  %1315 = vmatprep.subr.mxu0 0.0
  %1316 = vmatpush1.xpose.msra.mxu0 0.0
  %1317 = vmatprep.subr.mxu0 0.0
  %1318 = vmatpush1.xpose.msra.mxu0 0.0
  %1319 = vmatprep.subr.mxu0 0.0
  %1320 = vmatpush1.xpose.msra.mxu0 0.0
  %1321 = vmatprep.subr.mxu0 0.0
  %1322 = vmatpush1.xpose.msra.mxu0 0.0
  %1323 = vmatprep.subr.mxu0 0.0
  %1324 = vmatpush1.xpose.msra.mxu0 0.0
  %1325 = vmatprep.subr.mxu0 0.0
  %1326 = vmatpush1.xpose.msra.mxu0 0.0
  %1327 = vmatprep.subr.mxu0 0.0
  %1328 = vmatpush1.xpose.msra.mxu0 0.0
  %1329 = vmatprep.subr.mxu0 0.0
  %1330 = vmatpush1.xpose.msra.mxu0 0.0
  %1331 = vmatprep.subr.mxu0 0.0
  %1332 = vmatpush1.xpose.msra.mxu0 0.0
  %1333 = vmatprep.subr.mxu0 0.0
  %1334 = vmatpush1.xpose.msra.mxu0 0.0
  %1335 = vmatprep.subr.mxu0 0.0
  %1336 = vmatpush1.xpose.msra.mxu0 0.0
  %1337 = vmatprep.subr.mxu0 0.0
  %1338 = vmatpush1.xpose.msra.mxu0 0.0
  %1339 = vmatprep.subr.mxu0 0.0
  %1340 = vmatpush1.xpose.msra.mxu0 0.0
  %1341 = vmatprep.subr.mxu0 0.0
  %1342 = vmatpush1.xpose.msra.mxu0 0.0
  %1343 = vmatprep.subr.mxu0 0.0
  %1344 = vmatpush1.xpose.msra.mxu0 0.0
  %1345 = vmatprep.subr.mxu0 0.0
  %1346 = vmatpush1.xpose.msra.mxu0 0.0
  %1347 = vmatprep.subr.mxu0 0.0
  %1348 = vmatpush1.xpose.msra.mxu0 0.0
  %1349 = vmatprep.subr.mxu0 0.0
  %1350 = vmatpush1.xpose.msra.mxu0 0.0
  %1351 = vmatprep.subr.mxu0 0.0
  %1352 = vmatpush1.xpose.msra.mxu0 0.0
  %1353 = vmatprep.subr.mxu0 0.0
  %1354 = vmatpush1.xpose.msra.mxu0 0.0
  %1355 = vmatprep.subr.mxu0 0.0
  %1356 = vmatpush1.xpose.msra.mxu0 0.0
  %1357 = vmatprep.subr.mxu0 0.0
  %1358 = vmatpush1.xpose.msra.mxu0 0.0
  %1359 = vmatprep.subr.mxu0 0.0
  %1360 = vmatpush1.xpose.msra.mxu0 0.0
  %1361 = vmatprep.subr.mxu0 0.0
  %1362 = vmatpush1.xpose.msra.mxu0 0.0
  %1363 = vmatprep.subr.mxu0 0.0
  %1364 = vmatpush1.xpose.msra.mxu0 0.0
  %1365 = vmatprep.subr.mxu0 0.0
  %1366 = vmatpush1.xpose.msra.mxu0 0.0
  %1367 = vmatprep.subr.mxu0 0.0
  %1368 = vmatpush1.xpose.msra.mxu0 0.0
  %1369 = vmatprep.subr.mxu0 0.0
  %1370 = vmatpush1.xpose.msra.mxu0 0.0
  %1371 = vmatprep.subr.mxu0 0.0
  %1372 = vmatpush1.xpose.msra.mxu0 0.0
  %1373 = vmatprep.mubr.f32.mxu0 0.0
  %1374 = vmatmul.mubr.f32.gmra.mrb[0].mxu0 %v1301
  %v1375 = vpop.f32.mrb[0].mxu0
  %v1376 = vadd.f32 0.0, %v1375
  %v1377 = vpop.f32.mrb[0].mxu0
  %1378 = vmatprep.mubr.f32.mxu0 0.0
  %1379 = vmatmul.mubr.f32.gmra.mrb[0].mxu0 %v1303
  %v1380 = vpop.f32.mrb[0].mxu0
  %v1381 = vadd.f32 0.0, %v1380
  %v1382 = vpop.f32.mrb[0].mxu0
  %1383 = vdwg.mxu0
  %v1384 = vmul.f32 %v1376, 0.25
  %v1385 = vmul.f32 %v1381, 0.25
  %v1386 = vadd.f32 %v1384, %v34
  %v1387 = vadd.f32 %v1385, %v35
  %v1388 = vsel %vm133, %v1386, -inf
  %1389 = vmax.xlane.f32.xlu0 %v1388
  %v1390 = vpop.xlane.xlu0 %1389
  %v1391 = vsel %vm133, %v1387, -inf
  %1392 = vmax.xlane.f32.xlu0 %v1391
  %v1393 = vpop.xlane.xlu0 %1392
  %v1394 = vsub.f32 %v1386, %v1390
  %v1395 = vsub.f32 %v1387, %v1393
  %v1396 = vmul.f32 %v1394, 1.442695
  %v1397 = vpow.pop %v1396
  %v1398 = vmul.f32 %v1395, 1.442695
  %v1399 = vpow.pop %v1398
  %v1400 = vsel %vm133, %v1397, 0.0
  %1401 = vadd.xlane.f32.xlu0 %v1400
  %v1402 = vpop.xlane.xlu0 %1401
  %v1403 = vsel %vm133, %v1399, 0.0
  %1404 = vadd.xlane.f32.xlu0 %v1403
  %v1405 = vpop.xlane.xlu0 %1404
  %v1406 = vrcp.pop %v1402
  %v1407 = vrcp.pop %v1405
  %v1408 = vmul.f32 %v1397, %v1406
  %v1409 = vmul.f32 %v1399, %v1407
  %1410 = vrot.lane.b32.xlu0 %v1083, 48
  %v1411 = vpop.permute.xlu0 %1410
  %1412 = vrot.lane.b32.xlu0 %v1088, 48
  %v1413 = vpop.permute.xlu0 %1412
  %v1417 = vsel %vm133, %v1408, 0
  %v1420 = vsel %vm133, %v1409, 0
  %1422 = vmatprep.subr.mxu0 0.0
  %1423 = vmatpush1.msra.mxu0 %v1411
  %1424 = vmatprep.subr.mxu0 0.0
  %1425 = vmatpush1.msra.mxu0 %v1413
  %1426 = vmatprep.subr.mxu0 0.0
  %1427 = vmatpush1.msra.mxu0 0.0
  %1428 = vmatprep.subr.mxu0 0.0
  %1429 = vmatpush1.msra.mxu0 0.0
  %1430 = vmatprep.subr.mxu0 0.0
  %1431 = vmatpush1.msra.mxu0 0.0
  %1432 = vmatprep.subr.mxu0 0.0
  %1433 = vmatpush1.msra.mxu0 0.0
  %1434 = vmatprep.subr.mxu0 0.0
  %1435 = vmatpush1.msra.mxu0 0.0
  %1436 = vmatprep.subr.mxu0 0.0
  %1437 = vmatpush1.msra.mxu0 0.0
  %1438 = vmatprep.subr.mxu0 0.0
  %1439 = vmatpush1.msra.mxu0 0.0
  %1440 = vmatprep.subr.mxu0 0.0
  %1441 = vmatpush1.msra.mxu0 0.0
  %1442 = vmatprep.subr.mxu0 0.0
  %1443 = vmatpush1.msra.mxu0 0.0
  %1444 = vmatprep.subr.mxu0 0.0
  %1445 = vmatpush1.msra.mxu0 0.0
  %1446 = vmatprep.subr.mxu0 0.0
  %1447 = vmatpush1.msra.mxu0 0.0
  %1448 = vmatprep.subr.mxu0 0.0
  %1449 = vmatpush1.msra.mxu0 0.0
  %1450 = vmatprep.subr.mxu0 0.0
  %1451 = vmatpush1.msra.mxu0 0.0
  %1452 = vmatprep.subr.mxu0 0.0
  %1453 = vmatpush1.msra.mxu0 0.0
  %1454 = vmatprep.subr.mxu0 0.0
  %1455 = vmatpush1.msra.mxu0 0.0
  %1456 = vmatprep.subr.mxu0 0.0
  %1457 = vmatpush1.msra.mxu0 0.0
  %1458 = vmatprep.subr.mxu0 0.0
  %1459 = vmatpush1.msra.mxu0 0.0
  %1460 = vmatprep.subr.mxu0 0.0
  %1461 = vmatpush1.msra.mxu0 0.0
  %1462 = vmatprep.subr.mxu0 0.0
  %1463 = vmatpush1.msra.mxu0 0.0
  %1464 = vmatprep.subr.mxu0 0.0
  %1465 = vmatpush1.msra.mxu0 0.0
  %1466 = vmatprep.subr.mxu0 0.0
  %1467 = vmatpush1.msra.mxu0 0.0
  %1468 = vmatprep.subr.mxu0 0.0
  %1469 = vmatpush1.msra.mxu0 0.0
  %1470 = vmatprep.subr.mxu0 0.0
  %1471 = vmatpush1.msra.mxu0 0.0
  %1472 = vmatprep.subr.mxu0 0.0
  %1473 = vmatpush1.msra.mxu0 0.0
  %1474 = vmatprep.subr.mxu0 0.0
  %1475 = vmatpush1.msra.mxu0 0.0
  %1476 = vmatprep.subr.mxu0 0.0
  %1477 = vmatpush1.msra.mxu0 0.0
  %1478 = vmatprep.subr.mxu0 0.0
  %1479 = vmatpush1.msra.mxu0 0.0
  %1480 = vmatprep.subr.mxu0 0.0
  %1481 = vmatpush1.msra.mxu0 0.0
  %1482 = vmatprep.subr.mxu0 0.0
  %1483 = vmatpush1.msra.mxu0 0.0
  %1484 = vmatprep.subr.mxu0 0.0
  %1485 = vmatpush1.msra.mxu0 0.0
  %1486 = vmatprep.mubr.f32.mxu0 0.0
  %1487 = vmatmul.mubr.f32.gmra.mrb[0].mxu0 %v1417
  %v1488 = vpop.f32.mrb[0].mxu0
  %v1489 = vadd.f32 0.0, %v1488
  %v1490 = vpop.f32.mrb[0].mxu0
  %1491 = vmatprep.mubr.f32.mxu0 0.0
  %1492 = vmatmul.mubr.f32.gmra.mrb[0].mxu0 %v1420
  %v1493 = vpop.f32.mrb[0].mxu0
  %v1494 = vadd.f32 0.0, %v1493
  %v1495 = vpop.f32.mrb[0].mxu0
  %1496 = vdwg.mxu0
  %1499 = vrot.lane.b32.xlu0 %v1002, 32
  %v1500 = vpop.permute.xlu0 %1499
  %1501 = vrot.lane.b32.xlu0 %v1003, 32
  %v1502 = vpop.permute.xlu0 %1501
  %v1506 = vsel %vm133, %v1489, 0
  %v1509 = vsel %vm133, %v1494, 0
  %1511 = vmatprep.subr.mxu0 0.0
  %1512 = vmatpush1.msra.mxu0 %v1500
  %1513 = vmatprep.subr.mxu0 0.0
  %1514 = vmatpush1.msra.mxu0 %v1502
  %1515 = vmatprep.subr.mxu0 0.0
  %1516 = vmatpush1.msra.mxu0 0.0
  %1517 = vmatprep.subr.mxu0 0.0
  %1518 = vmatpush1.msra.mxu0 0.0
  %1519 = vmatprep.subr.mxu0 0.0
  %1520 = vmatpush1.msra.mxu0 0.0
  %1521 = vmatprep.subr.mxu0 0.0
  %1522 = vmatpush1.msra.mxu0 0.0
  %1523 = vmatprep.subr.mxu0 0.0
  %1524 = vmatpush1.msra.mxu0 0.0
  %1525 = vmatprep.subr.mxu0 0.0
  %1526 = vmatpush1.msra.mxu0 0.0
  %1527 = vmatprep.subr.mxu0 0.0
  %1528 = vmatpush1.msra.mxu0 0.0
  %1529 = vmatprep.subr.mxu0 0.0
  %1530 = vmatpush1.msra.mxu0 0.0
  %1531 = vmatprep.subr.mxu0 0.0
  %1532 = vmatpush1.msra.mxu0 0.0
  %1533 = vmatprep.subr.mxu0 0.0
  %1534 = vmatpush1.msra.mxu0 0.0
  %1535 = vmatprep.subr.mxu0 0.0
  %1536 = vmatpush1.msra.mxu0 0.0
  %1537 = vmatprep.subr.mxu0 0.0
  %1538 = vmatpush1.msra.mxu0 0.0
  %1539 = vmatprep.subr.mxu0 0.0
  %1540 = vmatpush1.msra.mxu0 0.0
  %1541 = vmatprep.subr.mxu0 0.0
  %1542 = vmatpush1.msra.mxu0 0.0
  %1543 = vmatprep.subr.mxu0 0.0
  %1544 = vmatpush1.msra.mxu0 0.0
  %1545 = vmatprep.subr.mxu0 0.0
  %1546 = vmatpush1.msra.mxu0 0.0
  %1547 = vmatprep.subr.mxu0 0.0
  %1548 = vmatpush1.msra.mxu0 0.0
  %1549 = vmatprep.subr.mxu0 0.0
  %1550 = vmatpush1.msra.mxu0 0.0
  %1551 = vmatprep.subr.mxu0 0.0
  %1552 = vmatpush1.msra.mxu0 0.0
  %1553 = vmatprep.subr.mxu0 0.0
  %1554 = vmatpush1.msra.mxu0 0.0
  %1555 = vmatprep.subr.mxu0 0.0
  %1556 = vmatpush1.msra.mxu0 0.0
  %1557 = vmatprep.subr.mxu0 0.0
  %1558 = vmatpush1.msra.mxu0 0.0
  %1559 = vmatprep.subr.mxu0 0.0
  %1560 = vmatpush1.msra.mxu0 0.0
  %1561 = vmatprep.subr.mxu0 0.0
  %1562 = vmatpush1.msra.mxu0 0.0
  %1563 = vmatprep.subr.mxu0 0.0
  %1564 = vmatpush1.msra.mxu0 0.0
  %1565 = vmatprep.subr.mxu0 0.0
  %1566 = vmatpush1.msra.mxu0 0.0
  %1567 = vmatprep.subr.mxu0 0.0
  %1568 = vmatpush1.msra.mxu0 0.0
  %1569 = vmatprep.subr.mxu0 0.0
  %1570 = vmatpush1.msra.mxu0 0.0
  %1571 = vmatprep.subr.mxu0 0.0
  %1572 = vmatpush1.msra.mxu0 0.0
  %1573 = vmatprep.subr.mxu0 0.0
  %1574 = vmatpush1.msra.mxu0 0.0
  %1575 = vmatprep.mubr.f32.mxu0 0.0
  %1576 = vmatmul.mubr.f32.gmra.mrb[0].mxu0 %v1506
  %v1577 = vpop.f32.mrb[0].mxu0
  %v1578 = vadd.f32 0.0, %v1577
  %v1579 = vpop.f32.mrb[0].mxu0
  %1580 = vmatprep.mubr.f32.mxu0 0.0
  %1581 = vmatmul.mubr.f32.gmra.mrb[0].mxu0 %v1509
  %v1582 = vpop.f32.mrb[0].mxu0
  %v1583 = vadd.f32 0.0, %v1582
  %v1584 = vpop.f32.mrb[0].mxu0
  %1585 = vdwg.mxu0
  %1588 = vrot.lane.b32.xlu0 %v1000, 32
  %v1589 = vpop.permute.xlu0 %1588
  %1590 = vrot.lane.b32.xlu0 %v1001, 32
  %v1591 = vpop.permute.xlu0 %1590
  %v1595 = vsel %vm133, %v1285, 0
  %v1598 = vsel %vm133, %v1290, 0
  %1600 = vmatprep.subr.mxu0 0.0
  %1601 = vmatpush1.msra.mxu0 %v1589
  %1602 = vmatprep.subr.mxu0 0.0
  %1603 = vmatpush1.msra.mxu0 %v1591
  %1604 = vmatprep.subr.mxu0 0.0
  %1605 = vmatpush1.msra.mxu0 0.0
  %1606 = vmatprep.subr.mxu0 0.0
  %1607 = vmatpush1.msra.mxu0 0.0
  %1608 = vmatprep.subr.mxu0 0.0
  %1609 = vmatpush1.msra.mxu0 0.0
  %1610 = vmatprep.subr.mxu0 0.0
  %1611 = vmatpush1.msra.mxu0 0.0
  %1612 = vmatprep.subr.mxu0 0.0
  %1613 = vmatpush1.msra.mxu0 0.0
  %1614 = vmatprep.subr.mxu0 0.0
  %1615 = vmatpush1.msra.mxu0 0.0
  %1616 = vmatprep.subr.mxu0 0.0
  %1617 = vmatpush1.msra.mxu0 0.0
  %1618 = vmatprep.subr.mxu0 0.0
  %1619 = vmatpush1.msra.mxu0 0.0
  %1620 = vmatprep.subr.mxu0 0.0
  %1621 = vmatpush1.msra.mxu0 0.0
  %1622 = vmatprep.subr.mxu0 0.0
  %1623 = vmatpush1.msra.mxu0 0.0
  %1624 = vmatprep.subr.mxu0 0.0
  %1625 = vmatpush1.msra.mxu0 0.0
  %1626 = vmatprep.subr.mxu0 0.0
  %1627 = vmatpush1.msra.mxu0 0.0
  %1628 = vmatprep.subr.mxu0 0.0
  %1629 = vmatpush1.msra.mxu0 0.0
  %1630 = vmatprep.subr.mxu0 0.0
  %1631 = vmatpush1.msra.mxu0 0.0
  %1632 = vmatprep.subr.mxu0 0.0
  %1633 = vmatpush1.msra.mxu0 0.0
  %1634 = vmatprep.subr.mxu0 0.0
  %1635 = vmatpush1.msra.mxu0 0.0
  %1636 = vmatprep.subr.mxu0 0.0
  %1637 = vmatpush1.msra.mxu0 0.0
  %1638 = vmatprep.subr.mxu0 0.0
  %1639 = vmatpush1.msra.mxu0 0.0
  %1640 = vmatprep.subr.mxu0 0.0
  %1641 = vmatpush1.msra.mxu0 0.0
  %1642 = vmatprep.subr.mxu0 0.0
  %1643 = vmatpush1.msra.mxu0 0.0
  %1644 = vmatprep.subr.mxu0 0.0
  %1645 = vmatpush1.msra.mxu0 0.0
  %1646 = vmatprep.subr.mxu0 0.0
  %1647 = vmatpush1.msra.mxu0 0.0
  %1648 = vmatprep.subr.mxu0 0.0
  %1649 = vmatpush1.msra.mxu0 0.0
  %1650 = vmatprep.subr.mxu0 0.0
  %1651 = vmatpush1.msra.mxu0 0.0
  %1652 = vmatprep.subr.mxu0 0.0
  %1653 = vmatpush1.msra.mxu0 0.0
  %1654 = vmatprep.subr.mxu0 0.0
  %1655 = vmatpush1.msra.mxu0 0.0
  %1656 = vmatprep.subr.mxu0 0.0
  %1657 = vmatpush1.msra.mxu0 0.0
  %1658 = vmatprep.subr.mxu0 0.0
  %1659 = vmatpush1.msra.mxu0 0.0
  %1660 = vmatprep.subr.mxu0 0.0
  %1661 = vmatpush1.msra.mxu0 0.0
  %1662 = vmatprep.subr.mxu0 0.0
  %1663 = vmatpush1.msra.mxu0 0.0
  %1664 = vmatprep.mubr.f32.mxu0 0.0
  %1665 = vmatmul.mubr.f32.gmra.mrb[0].mxu0 %v1595
  %v1666 = vpop.f32.mrb[0].mxu0
  %v1667 = vadd.f32 %v1578, %v1666
  %v1668 = vpop.f32.mrb[0].mxu0
  %1669 = vmatprep.mubr.f32.mxu0 0.0
  %1670 = vmatmul.mubr.f32.gmra.mrb[0].mxu0 %v1598
  %v1671 = vpop.f32.mrb[0].mxu0
  %v1672 = vadd.f32 %v1583, %v1671
  %v1673 = vpop.f32.mrb[0].mxu0
  %1674 = vdwg.mxu0
  %1676 = vrot.lane.b32.xlu0 %v1009, 32
  %v1677 = vpop.permute.xlu0 %1676
  %v1679 = vadd.f32 %v1667, %v1677
  %v1680 = vadd.f32 %v1672, %v1677
  %v1681 = vadd.f32 %v997, %v1679
  %v1682 = vadd.f32 %v998, %v1680
  %v1683 = vsel %vm45, %v1681, 0.0
  %1684 = vadd.xlane.f32.xlu0 %v1683
  %v1685 = vpop.xlane.xlu0 %1684
  %v1686 = vsel %vm45, %v1682, 0.0
  %1687 = vadd.xlane.f32.xlu0 %v1686
  %v1688 = vpop.xlane.xlu0 %1687
  %v1689 = vmul.f32 %v1685, %v726
  %v1690 = vmul.f32 %v1688, %v726
  %v1691 = vsub.f32 %v1681, %v1689
  %v1692 = vsub.f32 %v1682, %v1690
  %v1693 = vmul.f32 %v1691, %v1691
  %v1694 = vmul.f32 %v1692, %v1692
  %v1695 = vsel %vm45, %v1693, 0.0
  %1696 = vadd.xlane.f32.xlu0 %v1695
  %v1697 = vpop.xlane.xlu0 %1696
  %v1698 = vsel %vm45, %v1694, 0.0
  %1699 = vadd.xlane.f32.xlu0 %v1698
  %v1700 = vpop.xlane.xlu0 %1699
  %v1701 = vmul.f32 %v1697, %v726
  %v1702 = vmul.f32 %v1700, %v726
  %v1703 = vadd.f32 %v1701, 1e-12
  %v1704 = vadd.f32 %v1702, 1e-12
  %v1705 = vrsqrt.pop %v1703
  %v1706 = vrsqrt.pop %v1704
  %v1707 = vmul.f32 %v1691, %v1705
  %v1708 = vmul.f32 %v1692, %v1706
  %v1709 = vlaneseq
  %v1710 = vshrl.u32 %v1709, 7
  %v1711 = vsub.s32 2, %v1710
  %v1712 = vrot.slane %v1005, %v1711
  %v1713 = vmul.f32 %v1707, %v1712
  %v1714 = vmul.f32 %v1708, %v1712
  %1716 = vrot.lane.b32.xlu0 %v1712, 96
  %v1717 = vpop.permute.xlu0 %1716
  %v1719 = vadd.f32 %v1713, %v1717
  %v1720 = vadd.f32 %v1714, %v1717
  %s1721 = scalar_lea.vmem %s5, 32
  %v1722 = vld [vmem:[%s1721] sm:$0xff]
  %v1723 = vld [vmem:[%s1721 + $0x8] sm:$0xff]
  %v1724 = vld [vmem:[%s1721 + $0x10] sm:$0xff]
  %v1725 = vld [vmem:[%s1721 + $0x18] sm:$0xff]
  %v1726 = vlaneseq
  %v1727 = vshrl.u32 %v1726, 7
  %v1728 = vsub.s32 1, %v1727
  %v1729 = vrot.slane %v1005, %v1728
  %v1731 = vsel %vm45, %v1719, 0
  %v1734 = vsel %vm45, %v1720, 0
  %1736 = vmatprep.subr.mxu0 0.0
  %1737 = vmatpush1.msra.mxu0 %v1722
  %1738 = vmatprep.subr.mxu0 0.0
  %1739 = vmatpush1.msra.mxu0 %v1723
  %1740 = vmatprep.subr.mxu0 0.0
  %1741 = vmatpush1.msra.mxu0 %v1724
  %1742 = vmatprep.subr.mxu0 0.0
  %1743 = vmatpush1.msra.mxu0 %v1725
  %1744 = vmatprep.subr.mxu0 0.0
  %1745 = vmatpush1.msra.mxu0 0.0
  %1746 = vmatprep.subr.mxu0 0.0
  %1747 = vmatpush1.msra.mxu0 0.0
  %1748 = vmatprep.subr.mxu0 0.0
  %1749 = vmatpush1.msra.mxu0 0.0
  %1750 = vmatprep.subr.mxu0 0.0
  %1751 = vmatpush1.msra.mxu0 0.0
  %1752 = vmatprep.subr.mxu0 0.0
  %1753 = vmatpush1.msra.mxu0 0.0
  %1754 = vmatprep.subr.mxu0 0.0
  %1755 = vmatpush1.msra.mxu0 0.0
  %1756 = vmatprep.subr.mxu0 0.0
  %1757 = vmatpush1.msra.mxu0 0.0
  %1758 = vmatprep.subr.mxu0 0.0
  %1759 = vmatpush1.msra.mxu0 0.0
  %1760 = vmatprep.subr.mxu0 0.0
  %1761 = vmatpush1.msra.mxu0 0.0
  %1762 = vmatprep.subr.mxu0 0.0
  %1763 = vmatpush1.msra.mxu0 0.0
  %1764 = vmatprep.subr.mxu0 0.0
  %1765 = vmatpush1.msra.mxu0 0.0
  %1766 = vmatprep.subr.mxu0 0.0
  %1767 = vmatpush1.msra.mxu0 0.0
  %1768 = vmatprep.subr.mxu0 0.0
  %1769 = vmatpush1.msra.mxu0 0.0
  %1770 = vmatprep.subr.mxu0 0.0
  %1771 = vmatpush1.msra.mxu0 0.0
  %1772 = vmatprep.subr.mxu0 0.0
  %1773 = vmatpush1.msra.mxu0 0.0
  %1774 = vmatprep.subr.mxu0 0.0
  %1775 = vmatpush1.msra.mxu0 0.0
  %1776 = vmatprep.subr.mxu0 0.0
  %1777 = vmatpush1.msra.mxu0 0.0
  %1778 = vmatprep.subr.mxu0 0.0
  %1779 = vmatpush1.msra.mxu0 0.0
  %1780 = vmatprep.subr.mxu0 0.0
  %1781 = vmatpush1.msra.mxu0 0.0
  %1782 = vmatprep.subr.mxu0 0.0
  %1783 = vmatpush1.msra.mxu0 0.0
  %1784 = vmatprep.subr.mxu0 0.0
  %1785 = vmatpush1.msra.mxu0 0.0
  %1786 = vmatprep.subr.mxu0 0.0
  %1787 = vmatpush1.msra.mxu0 0.0
  %1788 = vmatprep.subr.mxu0 0.0
  %1789 = vmatpush1.msra.mxu0 0.0
  %1790 = vmatprep.subr.mxu0 0.0
  %1791 = vmatpush1.msra.mxu0 0.0
  %1792 = vmatprep.subr.mxu0 0.0
  %1793 = vmatpush1.msra.mxu0 0.0
  %1794 = vmatprep.subr.mxu0 0.0
  %1795 = vmatpush1.msra.mxu0 0.0
  %1796 = vmatprep.subr.mxu0 0.0
  %1797 = vmatpush1.msra.mxu0 0.0
  %1798 = vmatprep.subr.mxu0 0.0
  %1799 = vmatpush1.msra.mxu0 0.0
  %1800 = vmatprep.mubr.f32.mxu0 0.0
  %1801 = vmatmul.mubr.f32.gmra.mrb[0].mxu0 %v1731
  %v1802 = vpop.f32.mrb[0].mxu0
  %v1803 = vadd.f32 %v1729, %v1802
  %v1804 = vpop.f32.mrb[0].mxu0
  %1805 = vmatprep.mubr.f32.mxu0 0.0
  %1806 = vmatmul.mubr.f32.gmra.mrb[0].mxu0 %v1734
  %v1807 = vpop.f32.mrb[0].mxu0
  %v1808 = vadd.f32 %v1729, %v1807
  %v1809 = vpop.f32.mrb[0].mxu0
  %1810 = vdwg.mxu0
  %v1811 = vmul.f32 %v1803, 0.5
  %v1812 = vmul.f32 %v1808, 0.5
  %v1813 = vmul.f32 %v1803, 0.044715
  %v1814 = vmul.f32 %v1808, 0.044715
  %v1815 = vmul.f32 %v1813, %v1803
  %v1816 = vmul.f32 %v1814, %v1808
  %v1817 = vmul.f32 %v1815, %v1803
  %v1818 = vmul.f32 %v1816, %v1808
  %v1819 = vadd.f32 %v1803, %v1817
  %v1820 = vadd.f32 %v1808, %v1818
  %v1821 = vmul.f32 %v1819, 0.7978846
  %v1822 = vmul.f32 %v1820, 0.7978846
  %v1823 = vtanh.pop %v1821
  %v1824 = vtanh.pop %v1822
  %v1825 = vadd.f32 %v1823, 1.0
  %v1826 = vadd.f32 %v1824, 1.0
  %v1827 = vmul.f32 %v1811, %v1825
  %v1828 = vmul.f32 %v1812, %v1826
  %s1829 = scalar_lea.vmem %s6, 128
  %v1830 = vld [vmem:[%s1829] sm:$0xff]
  %v1831 = vld [vmem:[%s1829 + $0x8] sm:$0xff]
  %v1832 = vld [vmem:[%s1829 + $0x10] sm:$0xff]
  %v1833 = vld [vmem:[%s1829 + $0x18] sm:$0xff]
  %v1834 = vld [vmem:[%s1829 + $0x20] sm:$0xff]
  %v1835 = vld [vmem:[%s1829 + $0x28] sm:$0xff]
  %v1836 = vld [vmem:[%s1829 + $0x30] sm:$0xff]
  %v1837 = vld [vmem:[%s1829 + $0x38] sm:$0xff]
  %v1838 = vld [vmem:[%s1829 + $0x40] sm:$0xff]
  %v1839 = vld [vmem:[%s1829 + $0x48] sm:$0xff]
  %v1840 = vld [vmem:[%s1829 + $0x50] sm:$0xff]
  %v1841 = vld [vmem:[%s1829 + $0x58] sm:$0xff]
  %v1842 = vld [vmem:[%s1829 + $0x60] sm:$0xff]
  %v1843 = vld [vmem:[%s1829 + $0x68] sm:$0xff]
  %v1844 = vld [vmem:[%s1829 + $0x70] sm:$0xff]
  %v1845 = vld [vmem:[%s1829 + $0x78] sm:$0xff]
  %v1846 = vlaneseq
  %v1847 = vshrl.u32 %v1846, 7
  %v1848 = vsub.s32 3, %v1847
  %v1849 = vrot.slane %v1005, %v1848
  %1850 = vmatprep.subr.mxu0 0.0
  %1851 = vmatpush1.msra.mxu0 %v1830
  %1852 = vmatprep.subr.mxu0 0.0
  %1853 = vmatpush1.msra.mxu0 %v1831
  %1854 = vmatprep.subr.mxu0 0.0
  %1855 = vmatpush1.msra.mxu0 %v1832
  %1856 = vmatprep.subr.mxu0 0.0
  %1857 = vmatpush1.msra.mxu0 %v1833
  %1858 = vmatprep.subr.mxu0 0.0
  %1859 = vmatpush1.msra.mxu0 %v1834
  %1860 = vmatprep.subr.mxu0 0.0
  %1861 = vmatpush1.msra.mxu0 %v1835
  %1862 = vmatprep.subr.mxu0 0.0
  %1863 = vmatpush1.msra.mxu0 %v1836
  %1864 = vmatprep.subr.mxu0 0.0
  %1865 = vmatpush1.msra.mxu0 %v1837
  %1866 = vmatprep.subr.mxu0 0.0
  %1867 = vmatpush1.msra.mxu0 %v1838
  %1868 = vmatprep.subr.mxu0 0.0
  %1869 = vmatpush1.msra.mxu0 %v1839
  %1870 = vmatprep.subr.mxu0 0.0
  %1871 = vmatpush1.msra.mxu0 %v1840
  %1872 = vmatprep.subr.mxu0 0.0
  %1873 = vmatpush1.msra.mxu0 %v1841
  %1874 = vmatprep.subr.mxu0 0.0
  %1875 = vmatpush1.msra.mxu0 %v1842
  %1876 = vmatprep.subr.mxu0 0.0
  %1877 = vmatpush1.msra.mxu0 %v1843
  %1878 = vmatprep.subr.mxu0 0.0
  %1879 = vmatpush1.msra.mxu0 %v1844
  %1880 = vmatprep.subr.mxu0 0.0
  %1881 = vmatpush1.msra.mxu0 %v1845
  %1882 = vmatprep.subr.mxu0 0.0
  %1883 = vmatpush1.msra.mxu0 0.0
  %1884 = vmatprep.subr.mxu0 0.0
  %1885 = vmatpush1.msra.mxu0 0.0
  %1886 = vmatprep.subr.mxu0 0.0
  %1887 = vmatpush1.msra.mxu0 0.0
  %1888 = vmatprep.subr.mxu0 0.0
  %1889 = vmatpush1.msra.mxu0 0.0
  %1890 = vmatprep.subr.mxu0 0.0
  %1891 = vmatpush1.msra.mxu0 0.0
  %1892 = vmatprep.subr.mxu0 0.0
  %1893 = vmatpush1.msra.mxu0 0.0
  %1894 = vmatprep.subr.mxu0 0.0
  %1895 = vmatpush1.msra.mxu0 0.0
  %1896 = vmatprep.subr.mxu0 0.0
  %1897 = vmatpush1.msra.mxu0 0.0
  %1898 = vmatprep.subr.mxu0 0.0
  %1899 = vmatpush1.msra.mxu0 0.0
  %1900 = vmatprep.subr.mxu0 0.0
  %1901 = vmatpush1.msra.mxu0 0.0
  %1902 = vmatprep.subr.mxu0 0.0
  %1903 = vmatpush1.msra.mxu0 0.0
  %1904 = vmatprep.subr.mxu0 0.0
  %1905 = vmatpush1.msra.mxu0 0.0
  %1906 = vmatprep.subr.mxu0 0.0
  %1907 = vmatpush1.msra.mxu0 0.0
  %1908 = vmatprep.subr.mxu0 0.0
  %1909 = vmatpush1.msra.mxu0 0.0
  %1910 = vmatprep.subr.mxu0 0.0
  %1911 = vmatpush1.msra.mxu0 0.0
  %1912 = vmatprep.subr.mxu0 0.0
  %1913 = vmatpush1.msra.mxu0 0.0
  %1914 = vmatprep.mubr.f32.mxu0 0.0
  %1915 = vmatmul.mubr.f32.gmra.mrb[0].mxu0 %v1827
  %v1916 = vpop.f32.mrb[0].mxu0
  %v1917 = vadd.f32 %v1849, %v1916
  %v1918 = vpop.f32.mrb[0].mxu0
  %1919 = vmatprep.mubr.f32.mxu0 0.0
  %1920 = vmatmul.mubr.f32.gmra.mrb[0].mxu0 %v1828
  %v1921 = vpop.f32.mrb[0].mxu0
  %v1922 = vadd.f32 %v1849, %v1921
  %v1923 = vpop.f32.mrb[0].mxu0
  %1924 = vdwg.mxu0
  %v1925 = vadd.f32 %v1719, %v1917
  %v1926 = vadd.f32 %v1720, %v1922
  %v1927 = vsel %vm45, %v1925, 0.0
  %1928 = vadd.xlane.f32.xlu0 %v1927
  %v1929 = vpop.xlane.xlu0 %1928
  %v1930 = vsel %vm45, %v1926, 0.0
  %1931 = vadd.xlane.f32.xlu0 %v1930
  %v1932 = vpop.xlane.xlu0 %1931
  %v1933 = vmul.f32 %v1929, %v726
  %v1934 = vmul.f32 %v1932, %v726
  %v1935 = vsub.f32 %v1925, %v1933
  %v1936 = vsub.f32 %v1926, %v1934
  %v1937 = vmul.f32 %v1935, %v1935
  %v1938 = vmul.f32 %v1936, %v1936
  %v1939 = vsel %vm45, %v1937, 0.0
  %1940 = vadd.xlane.f32.xlu0 %v1939
  %v1941 = vpop.xlane.xlu0 %1940
  %v1942 = vsel %vm45, %v1938, 0.0
  %1943 = vadd.xlane.f32.xlu0 %v1942
  %v1944 = vpop.xlane.xlu0 %1943
  %v1945 = vmul.f32 %v1941, %v726
  %v1946 = vmul.f32 %v1944, %v726
  %v1947 = vadd.f32 %v1945, 1e-12
  %v1948 = vadd.f32 %v1946, 1e-12
  %v1949 = vrsqrt.pop %v1947
  %v1950 = vrsqrt.pop %v1948
  %v1951 = vmul.f32 %v1935, %v1949
  %v1952 = vmul.f32 %v1936, %v1950
  %1953 = vrot.lane.b32.xlu0 %v1712, 64
  %v1954 = vpop.permute.xlu0 %1953
  %v1956 = vmul.f32 %v1951, %v1954
  %v1957 = vmul.f32 %v1952, %v1954
  %1958 = vrot.lane.b32.xlu0 %v1712, 32
  %v1959 = vpop.permute.xlu0 %1958
  %v1961 = vadd.f32 %v1956, %v1959
  %v1962 = vadd.f32 %v1957, %v1959
  %v1963 = vld [vmem:[%s2] sm:$0x3]
  %v1965 = vsel %vm133, %v1963, 0
  %1967 = vmatprep.subr.mxu0 0.0
  %1968 = vmatpush1.msra.mxu0 %v1961
  %1969 = vmatprep.subr.mxu0 0.0
  %1970 = vmatpush1.msra.mxu0 %v1962
  %1971 = vmatprep.subr.mxu0 0.0
  %1972 = vmatpush1.msra.mxu0 0.0
  %1973 = vmatprep.subr.mxu0 0.0
  %1974 = vmatpush1.msra.mxu0 0.0
  %1975 = vmatprep.subr.mxu0 0.0
  %1976 = vmatpush1.msra.mxu0 0.0
  %1977 = vmatprep.subr.mxu0 0.0
  %1978 = vmatpush1.msra.mxu0 0.0
  %1979 = vmatprep.subr.mxu0 0.0
  %1980 = vmatpush1.msra.mxu0 0.0
  %1981 = vmatprep.subr.mxu0 0.0
  %1982 = vmatpush1.msra.mxu0 0.0
  %1983 = vmatprep.subr.mxu0 0.0
  %1984 = vmatpush1.msra.mxu0 0.0
  %1985 = vmatprep.subr.mxu0 0.0
  %1986 = vmatpush1.msra.mxu0 0.0
  %1987 = vmatprep.subr.mxu0 0.0
  %1988 = vmatpush1.msra.mxu0 0.0
  %1989 = vmatprep.subr.mxu0 0.0
  %1990 = vmatpush1.msra.mxu0 0.0
  %1991 = vmatprep.subr.mxu0 0.0
  %1992 = vmatpush1.msra.mxu0 0.0
  %1993 = vmatprep.subr.mxu0 0.0
  %1994 = vmatpush1.msra.mxu0 0.0
  %1995 = vmatprep.subr.mxu0 0.0
  %1996 = vmatpush1.msra.mxu0 0.0
  %1997 = vmatprep.subr.mxu0 0.0
  %1998 = vmatpush1.msra.mxu0 0.0
  %1999 = vmatprep.subr.mxu0 0.0
  %2000 = vmatpush1.msra.mxu0 0.0
  %2001 = vmatprep.subr.mxu0 0.0
  %2002 = vmatpush1.msra.mxu0 0.0
  %2003 = vmatprep.subr.mxu0 0.0
  %2004 = vmatpush1.msra.mxu0 0.0
  %2005 = vmatprep.subr.mxu0 0.0
  %2006 = vmatpush1.msra.mxu0 0.0
  %2007 = vmatprep.subr.mxu0 0.0
  %2008 = vmatpush1.msra.mxu0 0.0
  %2009 = vmatprep.subr.mxu0 0.0
  %2010 = vmatpush1.msra.mxu0 0.0
  %2011 = vmatprep.subr.mxu0 0.0
  %2012 = vmatpush1.msra.mxu0 0.0
  %2013 = vmatprep.subr.mxu0 0.0
  %2014 = vmatpush1.msra.mxu0 0.0
  %2015 = vmatprep.subr.mxu0 0.0
  %2016 = vmatpush1.msra.mxu0 0.0
  %2017 = vmatprep.subr.mxu0 0.0
  %2018 = vmatpush1.msra.mxu0 0.0
  %2019 = vmatprep.subr.mxu0 0.0
  %2020 = vmatpush1.msra.mxu0 0.0
  %2021 = vmatprep.subr.mxu0 0.0
  %2022 = vmatpush1.msra.mxu0 0.0
  %2023 = vmatprep.subr.mxu0 0.0
  %2024 = vmatpush1.msra.mxu0 0.0
  %2025 = vmatprep.subr.mxu0 0.0
  %2026 = vmatpush1.msra.mxu0 0.0
  %2027 = vmatprep.subr.mxu0 0.0
  %2028 = vmatpush1.msra.mxu0 0.0
  %2029 = vmatprep.subr.mxu0 0.0
  %2030 = vmatpush1.msra.mxu0 0.0
  %2031 = vmatprep.mubr.f32.mxu0 0.0
  %2032 = vmatmul.mubr.f32.gmra.mrb[0].mxu0 %v1965
  %v2033 = vpop.f32.mrb[0].mxu0
  %v2034 = vadd.f32 0.0, %v2033
  %v2035 = vpop.f32.mrb[0].mxu0
  %2036 = vdwg.mxu0
  %v2037 = vld [vmem:[%s7] sm:$0xff]
  %v2038 = vld [vmem:[%s7 + $0x8] sm:$0xff]
  %v2039 = vld [vmem:[%s7 + $0x10] sm:$0xff]
  %v2040 = vld [vmem:[%s7 + $0x18] sm:$0xff]
  %v2041 = vld [vmem:[%s8] sm:$0x1]
  %v2043 = vlaneseq
  %v2044 = vshrl.u32 %v2043, 7
  %v2045 = vsub.s32 0, %v2044
  %v2046 = vrot.slane %v2041, %v2045
  %v2049 = vsel %vm45, %v2034, 0
  %2051 = vmatprep.subr.mxu0 0.0
  %2052 = vmatpush1.msra.mxu0 %v2037
  %2053 = vmatprep.subr.mxu0 0.0
  %2054 = vmatpush1.msra.mxu0 %v2038
  %2055 = vmatprep.subr.mxu0 0.0
  %2056 = vmatpush1.msra.mxu0 %v2039
  %2057 = vmatprep.subr.mxu0 0.0
  %2058 = vmatpush1.msra.mxu0 %v2040
  %2059 = vmatprep.subr.mxu0 0.0
  %2060 = vmatpush1.msra.mxu0 0.0
  %2061 = vmatprep.subr.mxu0 0.0
  %2062 = vmatpush1.msra.mxu0 0.0
  %2063 = vmatprep.subr.mxu0 0.0
  %2064 = vmatpush1.msra.mxu0 0.0
  %2065 = vmatprep.subr.mxu0 0.0
  %2066 = vmatpush1.msra.mxu0 0.0
  %2067 = vmatprep.subr.mxu0 0.0
  %2068 = vmatpush1.msra.mxu0 0.0
  %2069 = vmatprep.subr.mxu0 0.0
  %2070 = vmatpush1.msra.mxu0 0.0
  %2071 = vmatprep.subr.mxu0 0.0
  %2072 = vmatpush1.msra.mxu0 0.0
  %2073 = vmatprep.subr.mxu0 0.0
  %2074 = vmatpush1.msra.mxu0 0.0
  %2075 = vmatprep.subr.mxu0 0.0
  %2076 = vmatpush1.msra.mxu0 0.0
  %2077 = vmatprep.subr.mxu0 0.0
  %2078 = vmatpush1.msra.mxu0 0.0
  %2079 = vmatprep.subr.mxu0 0.0
  %2080 = vmatpush1.msra.mxu0 0.0
  %2081 = vmatprep.subr.mxu0 0.0
  %2082 = vmatpush1.msra.mxu0 0.0
  %2083 = vmatprep.subr.mxu0 0.0
  %2084 = vmatpush1.msra.mxu0 0.0
  %2085 = vmatprep.subr.mxu0 0.0
  %2086 = vmatpush1.msra.mxu0 0.0
  %2087 = vmatprep.subr.mxu0 0.0
  %2088 = vmatpush1.msra.mxu0 0.0
  %2089 = vmatprep.subr.mxu0 0.0
  %2090 = vmatpush1.msra.mxu0 0.0
  %2091 = vmatprep.subr.mxu0 0.0
  %2092 = vmatpush1.msra.mxu0 0.0
  %2093 = vmatprep.subr.mxu0 0.0
  %2094 = vmatpush1.msra.mxu0 0.0
  %2095 = vmatprep.subr.mxu0 0.0
  %2096 = vmatpush1.msra.mxu0 0.0
  %2097 = vmatprep.subr.mxu0 0.0
  %2098 = vmatpush1.msra.mxu0 0.0
  %2099 = vmatprep.subr.mxu0 0.0
  %2100 = vmatpush1.msra.mxu0 0.0
  %2101 = vmatprep.subr.mxu0 0.0
  %2102 = vmatpush1.msra.mxu0 0.0
  %2103 = vmatprep.subr.mxu0 0.0
  %2104 = vmatpush1.msra.mxu0 0.0
  %2105 = vmatprep.subr.mxu0 0.0
  %2106 = vmatpush1.msra.mxu0 0.0
  %2107 = vmatprep.subr.mxu0 0.0
  %2108 = vmatpush1.msra.mxu0 0.0
  %2109 = vmatprep.subr.mxu0 0.0
  %2110 = vmatpush1.msra.mxu0 0.0
  %2111 = vmatprep.subr.mxu0 0.0
  %2112 = vmatpush1.msra.mxu0 0.0
  %2113 = vmatprep.subr.mxu0 0.0
  %2114 = vmatpush1.msra.mxu0 0.0
  %2115 = vmatprep.mubr.f32.mxu0 0.0
  %2116 = vmatmul.mubr.f32.gmra.mrb[0].mxu0 %v2049
  %v2117 = vpop.f32.mrb[0].mxu0
  %v2118 = vadd.f32 %v2046, %v2117
  %v2119 = vpop.f32.mrb[0].mxu0
  %2120 = vdwg.mxu0
  %vm2121 = vcmask 17408
  %2122 = vst.msk [vmem:[%s9] sm:$0x3] %vm2121, %v2118
  // Predicated region
  $region38: #{bert_forward.1} parent=0 // pred_check
    _
  $region39: #{bert_forward.1} parent=0 // pred_check_branch
    %2124 = sbr.rel (0) target = $region41
  $region40: #{bert_forward.1} parent=0 // pred_region
    _
  $region41: #{bert_forward.1} parent=0 // pred_fallthru
    _
  // Predicated region
  $region42: #{bert_forward.1} parent=0 // pred_check
    _
  $region43: #{bert_forward.1} parent=0 // pred_check_branch
    %2126 = sbr.rel (0) target = $region45
  $region44: #{bert_forward.1} parent=0 // pred_region
    _
  $region45: #{bert_forward.1} parent=0 // pred_fallthru
    _

</llo_original>
